<compile_context>
chip_gen: v7x
topology: tpu7x:2x2x1
jax: 0.10.0
libtpu: 0.0.40
codegen_flags: <defaults>
</compile_context>

<pallas_src>
import functools

import jax
import jax.numpy as jnp
from jax.experimental import pallas as pl
from jax.experimental.pallas import tpu as pltpu


# ----------------------------- Pallas kernel ------------------------------- #

def gin_encoder_kernel(m_ref, x_ref, mask_ref, p_ref,
                       w1a_ref, w1r_ref, b1s_ref, w2s_ref, b2s_ref,
                       gammas_ref, betas_ref, wfc_ref, bfc_ref,
                       out_ref, x_scr, *, nlayer, inv_n):
    """Fused GIN encoder: NLAYER x [aggregate -> MLP -> ReLU -> BN], pool, fc."""
    mask = mask_ref[...]                 # (Np, 1) f32, 1.0 for real nodes else 0.0
    m_bf = m_ref[...]                    # (Np, Np) bf16, M = A + (1+eps)*I, eps=0

    for l in range(nlayer):              # statically unrolled layer loop
        # Layer 0 reads the (bf16) input directly; later layers read the bf16
        # scratch written by the previous layer's BN.
        x_in = x_ref[...] if l == 0 else x_scr[...]
        w1 = w1a_ref[...] if l == 0 else w1r_ref[l - 1]

        # GIN aggregation: (A + (1+eps)I) @ x  (bf16 operands, f32 accumulation)
        h = jnp.dot(m_bf, x_in, preferred_element_type=jnp.float32)

        # GIN MLP: Linear -> ReLU -> Linear, then the BasicBlock ReLU.
        z = jnp.dot(h.astype(jnp.bfloat16), w1,
                    preferred_element_type=jnp.float32) + b1s_ref[l]
        z = jnp.maximum(z, 0.0)
        z = jnp.dot(z.astype(jnp.bfloat16), w2s_ref[l],
                    preferred_element_type=jnp.float32) + b2s_ref[l]
        z = jnp.maximum(z, 0.0)

        # BatchNorm1d over the real nodes only, one-pass masked statistics
        # (training-mode batch stats: biased variance, eps=1e-5).
        zm = z * mask
        s1 = jnp.sum(zm, axis=0, keepdims=True)
        s2 = jnp.sum(zm * z, axis=0, keepdims=True)
        mean = s1 * inv_n
        var = jnp.maximum(s2 * inv_n - mean * mean, 0.0)
        inv_std = jax.lax.rsqrt(var + 1e-5)
        x_scr[...] = ((gammas_ref[l] * inv_std) * (z - mean)
                      + betas_ref[l]).astype(jnp.bfloat16)

    # global_add_pool (P @ x) followed by relu(Linear).
    pooled = jnp.dot(p_ref[...], x_scr[...], preferred_element_type=jnp.float32)
    y = jnp.dot(pooled.astype(jnp.bfloat16), wfc_ref[...],
                preferred_element_type=jnp.float32) + bfc_ref[...]
    out_ref[...] = jnp.maximum(y, 0.0)
    # TODO(synk): nn.Dropout(0.2) is treated as identity (eval-mode).


# ------------------------------ wrapper ------------------------------------ #

_VMEM = pl.BlockSpec(memory_space=pltpu.MemorySpace.VMEM)


def _round_up(x, m):
    return (x + m - 1) // m * m


def _pad_to(a, shape):
    return jnp.pad(a, [(0, s - d) for s, d in zip(shape, a.shape)])


def gin_encoder_forward(x, edge_index, batch, num_graphs, params):
    """Runs the full GIN_Encoder forward in a single fused Pallas kernel."""
    N, F = x.shape
    layers = params["layers"]
    nlayer = len(layers)
    H = layers[0][2].shape[1]            # hidden dim (W2 columns)
    O = params["Wfc"].shape[1]

    # Padded sizes: lane dims -> multiples of 128; pooled-batch sublane -> 8.
    Fp = _round_up(F, 128)               # padded input-feature dim (layer 0 only)
    D = _round_up(H, 128)                # padded hidden dim
    Np = _round_up(N, 128)               # node dim (lane/contraction axis)
    Bp = _round_up(max(num_graphs, 8), 8)
    Op = _round_up(O, 128)

    # Graph prep, built directly in padded bf16 (no eye / one_hot / pad chains).
    src, dst = edge_index[0], edge_index[1]
    idx = jnp.arange(N)
    one = jnp.bfloat16(1.0)
    # Dense aggregation matrix M = A + (1+eps)*I with eps = 0 (GINConv default);
    # self-loops scattered straight onto the diagonal.
    M = (jnp.zeros((Np, Np), jnp.bfloat16)
         .at[dst, src].add(one)
         .at[idx, idx].add(one))
    # Pooling matrix for global_add_pool: P[g, n] = 1 iff batch[n] == g.
    P = jnp.zeros((Bp, Np), jnp.bfloat16).at[batch, idx].set(one)

    x_pad = _pad_to(x, (Np, Fp)).astype(jnp.bfloat16)
    mask = jnp.zeros((Np, 1), jnp.float32).at[idx, 0].set(1.0)

    # Per-layer params.  Layer 0's W1 keeps its own (Fp, D) shape; the remaining
    # W1s and all W2s are (D, D) and are stacked.  Biases / BN params stack as
    # (nlayer, 1, D) and stay f32.
    W1a = _pad_to(layers[0][0], (Fp, D)).astype(jnp.bfloat16)
    if nlayer > 1:
        W1r = jnp.stack([_pad_to(W1, (D, D)) for (W1, *_ ) in layers[1:]]
                        ).astype(jnp.bfloat16)
    else:
        W1r = jnp.zeros((1, D, D), jnp.bfloat16)     # dummy, unused
    b1s = jnp.stack([_pad_to(b1, (1, D)) for (_, b1, *_ ) in layers])
    W2s = jnp.stack([_pad_to(W2, (D, D)) for (_, _, W2, *_ ) in layers]
                    ).astype(jnp.bfloat16)
    b2s = jnp.stack([_pad_to(b2, (1, D)) for (_, _, _, b2, _, _) in layers])
    gms = jnp.stack([_pad_to(g, (1, D)) for (_, _, _, _, g, _) in layers])
    bts = jnp.stack([_pad_to(b, (1, D)) for (_, _, _, _, _, b) in layers])
    Wfc = _pad_to(params["Wfc"], (D, Op)).astype(jnp.bfloat16)
    bfc = _pad_to(params["bfc"], (1, Op))

    operands = (M, x_pad, mask, P, W1a, W1r, b1s, W2s, b2s, gms, bts, Wfc, bfc)

    # Explicit VMEM budget: operands + bf16 scratch + output, 2x headroom for
    # internal layout padding / compiler scratch, capped below v7x's 64 MiB.
    op_bytes = sum(int(a.size) * a.dtype.itemsize for a in operands)
    scratch_bytes = Np * D * 2                      # bf16 x_scr
    out_bytes = Bp * Op * 4
    vmem_limit = int(min(max(2 * (op_bytes + scratch_bytes + out_bytes) + (4 << 20),
                             32 << 20),
                         60 << 20))

    out_pad = pl.pallas_call(
        functools.partial(gin_encoder_kernel, nlayer=nlayer, inv_n=1.0 / N),
        out_shape=jax.ShapeDtypeStruct((Bp, Op), jnp.float32),
        in_specs=[_VMEM] * len(operands),
        out_specs=_VMEM,
        scratch_shapes=[pltpu.VMEM((Np, D), jnp.bfloat16)],
        compiler_params=pltpu.CompilerParams(vmem_limit_bytes=vmem_limit),
    )(*operands)

    return out_pad[:num_graphs, :O]


# ------------------------------- main --------------------------------------- #

if __name__ == "__main__":
    # Small, module-consistent shapes.
    N, E, B = 32, 64, 2                       # nodes, edges, graphs
    NLAYER, INDIM, HIDDEN, OUTDIM = 3, 16, 32, 16

    key = jax.random.PRNGKey(0)
    k_x, k_e, *k_params = jax.random.split(key, 3 + 3 * NLAYER)

    # Graph data.
    x0 = jax.random.normal(k_x, (N, INDIM), dtype=jnp.float32)
    edge_index = jax.random.randint(k_e, (2, E), 0, N)          # [src; dst]
    batch = jnp.concatenate([jnp.zeros(N // 2, jnp.int32),
                             jnp.ones(N - N // 2, jnp.int32)])

    # Deterministic parameter init (synthetic weights, PyTorch-default-like BN params).
    def make_layer(k, din, dh):
        k1, k2, k3, k4 = jax.random.split(k, 4)
        W1 = 0.1 * jax.random.normal(k1, (din, dh), jnp.float32)
        b1 = 0.1 * jax.random.normal(k2, (1, dh), jnp.float32)
        W2 = 0.1 * jax.random.normal(k3, (dh, dh), jnp.float32)
        b2 = 0.1 * jax.random.normal(k4, (1, dh), jnp.float32)
        gamma = jnp.ones((1, dh), jnp.float32)
        beta = jnp.zeros((1, dh), jnp.float32)
        return (W1, b1, W2, b2, gamma, beta)

    layers = [make_layer(k_params[0], INDIM, HIDDEN)]
    for i in range(1, NLAYER):
        layers.append(make_layer(k_params[i], HIDDEN, HIDDEN))

    kfc1, kfc2 = jax.random.split(k_params[NLAYER], 2)
    params = {
        "layers": layers,
        "Wfc": 0.1 * jax.random.normal(kfc1, (HIDDEN, OUTDIM), jnp.float32),
        "bfc": 0.1 * jax.random.normal(kfc2, (1, OUTDIM), jnp.float32),
    }

    out = gin_encoder_forward(x0, edge_index, batch, B, params)
    jax.block_until_ready(out)
    assert out.shape == (B, OUTDIM)
    print("KERNEL_OK")
</pallas_src>

<mosaic_0001>
module attributes {stable_mosaic.version = 11 : i64} {
  func.func @gin_encoder_kernel(%arg0: memref<128x128xbf16, #tpu.memory_space<vmem>>, %arg1: memref<128x128xbf16, #tpu.memory_space<vmem>>, %arg2: memref<128x1xf32, #tpu.memory_space<vmem>>, %arg3: memref<8x128xbf16, #tpu.memory_space<vmem>>, %arg4: memref<128x128xbf16, #tpu.memory_space<vmem>>, %arg5: memref<2x128x128xbf16, #tpu.memory_space<vmem>>, %arg6: memref<3x1x128xf32, #tpu.memory_space<vmem>>, %arg7: memref<3x128x128xbf16, #tpu.memory_space<vmem>>, %arg8: memref<3x1x128xf32, #tpu.memory_space<vmem>>, %arg9: memref<3x1x128xf32, #tpu.memory_space<vmem>>, %arg10: memref<3x1x128xf32, #tpu.memory_space<vmem>>, %arg11: memref<128x128xbf16, #tpu.memory_space<vmem>>, %arg12: memref<1x128xf32, #tpu.memory_space<vmem>>, %arg13: memref<8x128xf32, #tpu.memory_space<vmem>>, %arg14: memref<128x128xbf16, #tpu.memory_space<vmem>>) attributes {dimension_semantics = [], scalar_prefetch = 0 : i64, scratch_operands = 1 : i64, tpu.core_type = #tpu.core_type<tc>} {
    %c0 = arith.constant 0 : index
    %c0_0 = arith.constant 0 : index
    %0 = vector.load %arg2[%c0, %c0_0] : memref<128x1xf32, #tpu.memory_space<vmem>>, vector<128x1xf32>
    %c0_1 = arith.constant 0 : index
    %c0_2 = arith.constant 0 : index
    %1 = vector.load %arg0[%c0_1, %c0_2] : memref<128x128xbf16, #tpu.memory_space<vmem>>, vector<128x128xbf16>
    %c0_3 = arith.constant 0 : index
    %c0_4 = arith.constant 0 : index
    %2 = vector.load %arg1[%c0_3, %c0_4] : memref<128x128xbf16, #tpu.memory_space<vmem>>, vector<128x128xbf16>
    %c0_5 = arith.constant 0 : index
    %c0_6 = arith.constant 0 : index
    %3 = vector.load %arg4[%c0_5, %c0_6] : memref<128x128xbf16, #tpu.memory_space<vmem>>, vector<128x128xbf16>
    %cst = arith.constant dense<0.000000e+00> : vector<128x128xf32>
    %4 = tpu.matmul %1, %2, %cst {dimension_numbers = #tpu.dot_dimension_numbers<[1], [0], [0], [1], [0, 0, 1, 1], [], []>} : vector<128x128xbf16>, vector<128x128xbf16>, vector<128x128xf32> -> vector<128x128xf32>
    %5 = arith.truncf %4 : vector<128x128xf32> to vector<128x128xbf16>
    %cst_7 = arith.constant dense<0.000000e+00> : vector<128x128xf32>
    %6 = tpu.matmul %5, %3, %cst_7 {dimension_numbers = #tpu.dot_dimension_numbers<[1], [0], [0], [1], [0, 0, 1, 1], [], []>} : vector<128x128xbf16>, vector<128x128xbf16>, vector<128x128xf32> -> vector<128x128xf32>
    %c0_8 = arith.constant 0 : index
    %c0_9 = arith.constant 0 : index
    %c0_10 = arith.constant 0 : index
    %7 = vector.load %arg6[%c0_8, %c0_9, %c0_10] : memref<3x1x128xf32, #tpu.memory_space<vmem>>, vector<1x1x128xf32>
    %8 = vector.shape_cast %7 : vector<1x1x128xf32> to vector<1x128xf32>
    %9 = vector.broadcast %8 : vector<1x128xf32> to vector<128x128xf32>
    %10 = arith.addf %6, %9 : vector<128x128xf32>
    %cst_11 = arith.constant 0.000000e+00 : f32
    %11 = vector.broadcast %cst_11 : f32 to vector<128x128xf32>
    %12 = arith.maximumf %10, %11 : vector<128x128xf32>
    %13 = arith.truncf %12 : vector<128x128xf32> to vector<128x128xbf16>
    %c0_12 = arith.constant 0 : index
    %c0_13 = arith.constant 0 : index
    %c0_14 = arith.constant 0 : index
    %14 = vector.load %arg7[%c0_12, %c0_13, %c0_14] : memref<3x128x128xbf16, #tpu.memory_space<vmem>>, vector<1x128x128xbf16>
    %15 = vector.shape_cast %14 : vector<1x128x128xbf16> to vector<128x128xbf16>
    %cst_15 = arith.constant dense<0.000000e+00> : vector<128x128xf32>
    %16 = tpu.matmul %13, %15, %cst_15 {dimension_numbers = #tpu.dot_dimension_numbers<[1], [0], [0], [1], [0, 0, 1, 1], [], []>} : vector<128x128xbf16>, vector<128x128xbf16>, vector<128x128xf32> -> vector<128x128xf32>
    %c0_16 = arith.constant 0 : index
    %c0_17 = arith.constant 0 : index
    %c0_18 = arith.constant 0 : index
    %17 = vector.load %arg8[%c0_16, %c0_17, %c0_18] : memref<3x1x128xf32, #tpu.memory_space<vmem>>, vector<1x1x128xf32>
    %18 = vector.shape_cast %17 : vector<1x1x128xf32> to vector<1x128xf32>
    %19 = vector.broadcast %18 : vector<1x128xf32> to vector<128x128xf32>
    %20 = arith.addf %16, %19 : vector<128x128xf32>
    %cst_19 = arith.constant 0.000000e+00 : f32
    %21 = vector.broadcast %cst_19 : f32 to vector<128x128xf32>
    %22 = arith.maximumf %20, %21 : vector<128x128xf32>
    %23 = vector.broadcast %0 : vector<128x1xf32> to vector<128x128xf32>
    %24 = arith.mulf %22, %23 : vector<128x128xf32>
    %cst_20 = arith.constant dense<0.000000e+00> : vector<128xf32>
    %25 = vector.multi_reduction <add>, %24, %cst_20 [0] : vector<128x128xf32> to vector<128xf32>
    %26 = vector.shape_cast %25 : vector<128xf32> to vector<1x128xf32>
    %27 = arith.mulf %24, %22 : vector<128x128xf32>
    %cst_21 = arith.constant dense<0.000000e+00> : vector<128xf32>
    %28 = vector.multi_reduction <add>, %27, %cst_21 [0] : vector<128x128xf32> to vector<128xf32>
    %29 = vector.shape_cast %28 : vector<128xf32> to vector<1x128xf32>
    %cst_22 = arith.constant 3.125000e-02 : f32
    %30 = vector.broadcast %cst_22 : f32 to vector<1x128xf32>
    %31 = arith.mulf %26, %30 : vector<1x128xf32>
    %cst_23 = arith.constant 3.125000e-02 : f32
    %32 = vector.broadcast %cst_23 : f32 to vector<1x128xf32>
    %33 = arith.mulf %29, %32 : vector<1x128xf32>
    %34 = arith.mulf %31, %31 : vector<1x128xf32>
    %35 = arith.subf %33, %34 : vector<1x128xf32>
    %cst_24 = arith.constant 0.000000e+00 : f32
    %36 = vector.broadcast %cst_24 : f32 to vector<1x128xf32>
    %37 = arith.maximumf %35, %36 : vector<1x128xf32>
    %cst_25 = arith.constant 9.99999974E-6 : f32
    %38 = vector.broadcast %cst_25 : f32 to vector<1x128xf32>
    %39 = arith.addf %37, %38 : vector<1x128xf32>
    %40 = math.rsqrt %39 : vector<1x128xf32>
    %c0_26 = arith.constant 0 : index
    %c0_27 = arith.constant 0 : index
    %c0_28 = arith.constant 0 : index
    %41 = vector.load %arg9[%c0_26, %c0_27, %c0_28] : memref<3x1x128xf32, #tpu.memory_space<vmem>>, vector<1x1x128xf32>
    %42 = vector.shape_cast %41 : vector<1x1x128xf32> to vector<1x128xf32>
    %43 = arith.mulf %42, %40 : vector<1x128xf32>
    %44 = vector.broadcast %31 : vector<1x128xf32> to vector<128x128xf32>
    %45 = arith.subf %22, %44 : vector<128x128xf32>
    %46 = vector.broadcast %43 : vector<1x128xf32> to vector<128x128xf32>
    %47 = arith.mulf %46, %45 : vector<128x128xf32>
    %c0_29 = arith.constant 0 : index
    %c0_30 = arith.constant 0 : index
    %c0_31 = arith.constant 0 : index
    %48 = vector.load %arg10[%c0_29, %c0_30, %c0_31] : memref<3x1x128xf32, #tpu.memory_space<vmem>>, vector<1x1x128xf32>
    %49 = vector.shape_cast %48 : vector<1x1x128xf32> to vector<1x128xf32>
    %50 = vector.broadcast %49 : vector<1x128xf32> to vector<128x128xf32>
    %51 = arith.addf %47, %50 : vector<128x128xf32>
    %52 = arith.truncf %51 : vector<128x128xf32> to vector<128x128xbf16>
    %c0_32 = arith.constant 0 : index
    %c0_33 = arith.constant 0 : index
    %53 = vector.load %arg14[%c0_32, %c0_33] : memref<128x128xbf16, #tpu.memory_space<vmem>>, vector<128x128xbf16>
    tpu.vector_store %arg14[%c0_32, %c0_33], %52 {strides = array<i32>} : memref<128x128xbf16, #tpu.memory_space<vmem>>, vector<128x128xbf16>,
    %c0_34 = arith.constant 0 : index
    %c0_35 = arith.constant 0 : index
    %54 = vector.load %arg14[%c0_34, %c0_35] : memref<128x128xbf16, #tpu.memory_space<vmem>>, vector<128x128xbf16>
    %c0_36 = arith.constant 0 : index
    %c0_37 = arith.constant 0 : index
    %c0_38 = arith.constant 0 : index
    %55 = vector.load %arg5[%c0_36, %c0_37, %c0_38] : memref<2x128x128xbf16, #tpu.memory_space<vmem>>, vector<1x128x128xbf16>
    %56 = vector.shape_cast %55 : vector<1x128x128xbf16> to vector<128x128xbf16>
    %cst_39 = arith.constant dense<0.000000e+00> : vector<128x128xf32>
    %57 = tpu.matmul %1, %54, %cst_39 {dimension_numbers = #tpu.dot_dimension_numbers<[1], [0], [0], [1], [0, 0, 1, 1], [], []>} : vector<128x128xbf16>, vector<128x128xbf16>, vector<128x128xf32> -> vector<128x128xf32>
    %58 = arith.truncf %57 : vector<128x128xf32> to vector<128x128xbf16>
    %cst_40 = arith.constant dense<0.000000e+00> : vector<128x128xf32>
    %59 = tpu.matmul %58, %56, %cst_40 {dimension_numbers = #tpu.dot_dimension_numbers<[1], [0], [0], [1], [0, 0, 1, 1], [], []>} : vector<128x128xbf16>, vector<128x128xbf16>, vector<128x128xf32> -> vector<128x128xf32>
    %c1 = arith.constant 1 : index
    %c0_41 = arith.constant 0 : index
    %c0_42 = arith.constant 0 : index
    %60 = vector.load %arg6[%c1, %c0_41, %c0_42] : memref<3x1x128xf32, #tpu.memory_space<vmem>>, vector<1x1x128xf32>
    %61 = vector.shape_cast %60 : vector<1x1x128xf32> to vector<1x128xf32>
    %62 = vector.broadcast %61 : vector<1x128xf32> to vector<128x128xf32>
    %63 = arith.addf %59, %62 : vector<128x128xf32>
    %cst_43 = arith.constant 0.000000e+00 : f32
    %64 = vector.broadcast %cst_43 : f32 to vector<128x128xf32>
    %65 = arith.maximumf %63, %64 : vector<128x128xf32>
    %66 = arith.truncf %65 : vector<128x128xf32> to vector<128x128xbf16>
    %c1_44 = arith.constant 1 : index
    %c0_45 = arith.constant 0 : index
    %c0_46 = arith.constant 0 : index
    %67 = vector.load %arg7[%c1_44, %c0_45, %c0_46] : memref<3x128x128xbf16, #tpu.memory_space<vmem>>, vector<1x128x128xbf16>
    %68 = vector.shape_cast %67 : vector<1x128x128xbf16> to vector<128x128xbf16>
    %cst_47 = arith.constant dense<0.000000e+00> : vector<128x128xf32>
    %69 = tpu.matmul %66, %68, %cst_47 {dimension_numbers = #tpu.dot_dimension_numbers<[1], [0], [0], [1], [0, 0, 1, 1], [], []>} : vector<128x128xbf16>, vector<128x128xbf16>, vector<128x128xf32> -> vector<128x128xf32>
    %c1_48 = arith.constant 1 : index
    %c0_49 = arith.constant 0 : index
    %c0_50 = arith.constant 0 : index
    %70 = vector.load %arg8[%c1_48, %c0_49, %c0_50] : memref<3x1x128xf32, #tpu.memory_space<vmem>>, vector<1x1x128xf32>
    %71 = vector.shape_cast %70 : vector<1x1x128xf32> to vector<1x128xf32>
    %72 = vector.broadcast %71 : vector<1x128xf32> to vector<128x128xf32>
    %73 = arith.addf %69, %72 : vector<128x128xf32>
    %cst_51 = arith.constant 0.000000e+00 : f32
    %74 = vector.broadcast %cst_51 : f32 to vector<128x128xf32>
    %75 = arith.maximumf %73, %74 : vector<128x128xf32>
    %76 = vector.broadcast %0 : vector<128x1xf32> to vector<128x128xf32>
    %77 = arith.mulf %75, %76 : vector<128x128xf32>
    %cst_52 = arith.constant dense<0.000000e+00> : vector<128xf32>
    %78 = vector.multi_reduction <add>, %77, %cst_52 [0] : vector<128x128xf32> to vector<128xf32>
    %79 = vector.shape_cast %78 : vector<128xf32> to vector<1x128xf32>
    %80 = arith.mulf %77, %75 : vector<128x128xf32>
    %cst_53 = arith.constant dense<0.000000e+00> : vector<128xf32>
    %81 = vector.multi_reduction <add>, %80, %cst_53 [0] : vector<128x128xf32> to vector<128xf32>
    %82 = vector.shape_cast %81 : vector<128xf32> to vector<1x128xf32>
    %cst_54 = arith.constant 3.125000e-02 : f32
    %83 = vector.broadcast %cst_54 : f32 to vector<1x128xf32>
    %84 = arith.mulf %79, %83 : vector<1x128xf32>
    %cst_55 = arith.constant 3.125000e-02 : f32
    %85 = vector.broadcast %cst_55 : f32 to vector<1x128xf32>
    %86 = arith.mulf %82, %85 : vector<1x128xf32>
    %87 = arith.mulf %84, %84 : vector<1x128xf32>
    %88 = arith.subf %86, %87 : vector<1x128xf32>
    %cst_56 = arith.constant 0.000000e+00 : f32
    %89 = vector.broadcast %cst_56 : f32 to vector<1x128xf32>
    %90 = arith.maximumf %88, %89 : vector<1x128xf32>
    %cst_57 = arith.constant 9.99999974E-6 : f32
    %91 = vector.broadcast %cst_57 : f32 to vector<1x128xf32>
    %92 = arith.addf %90, %91 : vector<1x128xf32>
    %93 = math.rsqrt %92 : vector<1x128xf32>
    %c1_58 = arith.constant 1 : index
    %c0_59 = arith.constant 0 : index
    %c0_60 = arith.constant 0 : index
    %94 = vector.load %arg9[%c1_58, %c0_59, %c0_60] : memref<3x1x128xf32, #tpu.memory_space<vmem>>, vector<1x1x128xf32>
    %95 = vector.shape_cast %94 : vector<1x1x128xf32> to vector<1x128xf32>
    %96 = arith.mulf %95, %93 : vector<1x128xf32>
    %97 = vector.broadcast %84 : vector<1x128xf32> to vector<128x128xf32>
    %98 = arith.subf %75, %97 : vector<128x128xf32>
    %99 = vector.broadcast %96 : vector<1x128xf32> to vector<128x128xf32>
    %100 = arith.mulf %99, %98 : vector<128x128xf32>
    %c1_61 = arith.constant 1 : index
    %c0_62 = arith.constant 0 : index
    %c0_63 = arith.constant 0 : index
    %101 = vector.load %arg10[%c1_61, %c0_62, %c0_63] : memref<3x1x128xf32, #tpu.memory_space<vmem>>, vector<1x1x128xf32>
    %102 = vector.shape_cast %101 : vector<1x1x128xf32> to vector<1x128xf32>
    %103 = vector.broadcast %102 : vector<1x128xf32> to vector<128x128xf32>
    %104 = arith.addf %100, %103 : vector<128x128xf32>
    %105 = arith.truncf %104 : vector<128x128xf32> to vector<128x128xbf16>
    %c0_64 = arith.constant 0 : index
    %c0_65 = arith.constant 0 : index
    %106 = vector.load %arg14[%c0_64, %c0_65] : memref<128x128xbf16, #tpu.memory_space<vmem>>, vector<128x128xbf16>
    tpu.vector_store %arg14[%c0_64, %c0_65], %105 {strides = array<i32>} : memref<128x128xbf16, #tpu.memory_space<vmem>>, vector<128x128xbf16>,
    %c0_66 = arith.constant 0 : index
    %c0_67 = arith.constant 0 : index
    %107 = vector.load %arg14[%c0_66, %c0_67] : memref<128x128xbf16, #tpu.memory_space<vmem>>, vector<128x128xbf16>
    %c1_68 = arith.constant 1 : index
    %c0_69 = arith.constant 0 : index
    %c0_70 = arith.constant 0 : index
    %108 = vector.load %arg5[%c1_68, %c0_69, %c0_70] : memref<2x128x128xbf16, #tpu.memory_space<vmem>>, vector<1x128x128xbf16>
    %109 = vector.shape_cast %108 : vector<1x128x128xbf16> to vector<128x128xbf16>
    %cst_71 = arith.constant dense<0.000000e+00> : vector<128x128xf32>
    %110 = tpu.matmul %1, %107, %cst_71 {dimension_numbers = #tpu.dot_dimension_numbers<[1], [0], [0], [1], [0, 0, 1, 1], [], []>} : vector<128x128xbf16>, vector<128x128xbf16>, vector<128x128xf32> -> vector<128x128xf32>
    %111 = arith.truncf %110 : vector<128x128xf32> to vector<128x128xbf16>
    %cst_72 = arith.constant dense<0.000000e+00> : vector<128x128xf32>
    %112 = tpu.matmul %111, %109, %cst_72 {dimension_numbers = #tpu.dot_dimension_numbers<[1], [0], [0], [1], [0, 0, 1, 1], [], []>} : vector<128x128xbf16>, vector<128x128xbf16>, vector<128x128xf32> -> vector<128x128xf32>
    %c2 = arith.constant 2 : index
    %c0_73 = arith.constant 0 : index
    %c0_74 = arith.constant 0 : index
    %113 = vector.load %arg6[%c2, %c0_73, %c0_74] : memref<3x1x128xf32, #tpu.memory_space<vmem>>, vector<1x1x128xf32>
    %114 = vector.shape_cast %113 : vector<1x1x128xf32> to vector<1x128xf32>
    %115 = vector.broadcast %114 : vector<1x128xf32> to vector<128x128xf32>
    %116 = arith.addf %112, %115 : vector<128x128xf32>
    %cst_75 = arith.constant 0.000000e+00 : f32
    %117 = vector.broadcast %cst_75 : f32 to vector<128x128xf32>
    %118 = arith.maximumf %116, %117 : vector<128x128xf32>
    %119 = arith.truncf %118 : vector<128x128xf32> to vector<128x128xbf16>
    %c2_76 = arith.constant 2 : index
    %c0_77 = arith.constant 0 : index
    %c0_78 = arith.constant 0 : index
    %120 = vector.load %arg7[%c2_76, %c0_77, %c0_78] : memref<3x128x128xbf16, #tpu.memory_space<vmem>>, vector<1x128x128xbf16>
    %121 = vector.shape_cast %120 : vector<1x128x128xbf16> to vector<128x128xbf16>
    %cst_79 = arith.constant dense<0.000000e+00> : vector<128x128xf32>
    %122 = tpu.matmul %119, %121, %cst_79 {dimension_numbers = #tpu.dot_dimension_numbers<[1], [0], [0], [1], [0, 0, 1, 1], [], []>} : vector<128x128xbf16>, vector<128x128xbf16>, vector<128x128xf32> -> vector<128x128xf32>
    %c2_80 = arith.constant 2 : index
    %c0_81 = arith.constant 0 : index
    %c0_82 = arith.constant 0 : index
    %123 = vector.load %arg8[%c2_80, %c0_81, %c0_82] : memref<3x1x128xf32, #tpu.memory_space<vmem>>, vector<1x1x128xf32>
    %124 = vector.shape_cast %123 : vector<1x1x128xf32> to vector<1x128xf32>
    %125 = vector.broadcast %124 : vector<1x128xf32> to vector<128x128xf32>
    %126 = arith.addf %122, %125 : vector<128x128xf32>
    %cst_83 = arith.constant 0.000000e+00 : f32
    %127 = vector.broadcast %cst_83 : f32 to vector<128x128xf32>
    %128 = arith.maximumf %126, %127 : vector<128x128xf32>
    %129 = vector.broadcast %0 : vector<128x1xf32> to vector<128x128xf32>
    %130 = arith.mulf %128, %129 : vector<128x128xf32>
    %cst_84 = arith.constant dense<0.000000e+00> : vector<128xf32>
    %131 = vector.multi_reduction <add>, %130, %cst_84 [0] : vector<128x128xf32> to vector<128xf32>
    %132 = vector.shape_cast %131 : vector<128xf32> to vector<1x128xf32>
    %133 = arith.mulf %130, %128 : vector<128x128xf32>
    %cst_85 = arith.constant dense<0.000000e+00> : vector<128xf32>
    %134 = vector.multi_reduction <add>, %133, %cst_85 [0] : vector<128x128xf32> to vector<128xf32>
    %135 = vector.shape_cast %134 : vector<128xf32> to vector<1x128xf32>
    %cst_86 = arith.constant 3.125000e-02 : f32
    %136 = vector.broadcast %cst_86 : f32 to vector<1x128xf32>
    %137 = arith.mulf %132, %136 : vector<1x128xf32>
    %cst_87 = arith.constant 3.125000e-02 : f32
    %138 = vector.broadcast %cst_87 : f32 to vector<1x128xf32>
    %139 = arith.mulf %135, %138 : vector<1x128xf32>
    %140 = arith.mulf %137, %137 : vector<1x128xf32>
    %141 = arith.subf %139, %140 : vector<1x128xf32>
    %cst_88 = arith.constant 0.000000e+00 : f32
    %142 = vector.broadcast %cst_88 : f32 to vector<1x128xf32>
    %143 = arith.maximumf %141, %142 : vector<1x128xf32>
    %cst_89 = arith.constant 9.99999974E-6 : f32
    %144 = vector.broadcast %cst_89 : f32 to vector<1x128xf32>
    %145 = arith.addf %143, %144 : vector<1x128xf32>
    %146 = math.rsqrt %145 : vector<1x128xf32>
    %c2_90 = arith.constant 2 : index
    %c0_91 = arith.constant 0 : index
    %c0_92 = arith.constant 0 : index
    %147 = vector.load %arg9[%c2_90, %c0_91, %c0_92] : memref<3x1x128xf32, #tpu.memory_space<vmem>>, vector<1x1x128xf32>
    %148 = vector.shape_cast %147 : vector<1x1x128xf32> to vector<1x128xf32>
    %149 = arith.mulf %148, %146 : vector<1x128xf32>
    %150 = vector.broadcast %137 : vector<1x128xf32> to vector<128x128xf32>
    %151 = arith.subf %128, %150 : vector<128x128xf32>
    %152 = vector.broadcast %149 : vector<1x128xf32> to vector<128x128xf32>
    %153 = arith.mulf %152, %151 : vector<128x128xf32>
    %c2_93 = arith.constant 2 : index
    %c0_94 = arith.constant 0 : index
    %c0_95 = arith.constant 0 : index
    %154 = vector.load %arg10[%c2_93, %c0_94, %c0_95] : memref<3x1x128xf32, #tpu.memory_space<vmem>>, vector<1x1x128xf32>
    %155 = vector.shape_cast %154 : vector<1x1x128xf32> to vector<1x128xf32>
    %156 = vector.broadcast %155 : vector<1x128xf32> to vector<128x128xf32>
    %157 = arith.addf %153, %156 : vector<128x128xf32>
    %158 = arith.truncf %157 : vector<128x128xf32> to vector<128x128xbf16>
    %c0_96 = arith.constant 0 : index
    %c0_97 = arith.constant 0 : index
    %159 = vector.load %arg14[%c0_96, %c0_97] : memref<128x128xbf16, #tpu.memory_space<vmem>>, vector<128x128xbf16>
    tpu.vector_store %arg14[%c0_96, %c0_97], %158 {strides = array<i32>} : memref<128x128xbf16, #tpu.memory_space<vmem>>, vector<128x128xbf16>,
    %c0_98 = arith.constant 0 : index
    %c0_99 = arith.constant 0 : index
    %160 = vector.load %arg3[%c0_98, %c0_99] : memref<8x128xbf16, #tpu.memory_space<vmem>>, vector<8x128xbf16>
    %c0_100 = arith.constant 0 : index
    %c0_101 = arith.constant 0 : index
    %161 = vector.load %arg14[%c0_100, %c0_101] : memref<128x128xbf16, #tpu.memory_space<vmem>>, vector<128x128xbf16>
    %cst_102 = arith.constant dense<0.000000e+00> : vector<8x128xf32>
    %162 = tpu.matmul %160, %161, %cst_102 {dimension_numbers = #tpu.dot_dimension_numbers<[1], [0], [0], [1], [0, 0, 1, 1], [], []>} : vector<8x128xbf16>, vector<128x128xbf16>, vector<8x128xf32> -> vector<8x128xf32>
    %163 = arith.truncf %162 : vector<8x128xf32> to vector<8x128xbf16>
    %c0_103 = arith.constant 0 : index
    %c0_104 = arith.constant 0 : index
    %164 = vector.load %arg11[%c0_103, %c0_104] : memref<128x128xbf16, #tpu.memory_space<vmem>>, vector<128x128xbf16>
    %cst_105 = arith.constant dense<0.000000e+00> : vector<8x128xf32>
    %165 = tpu.matmul %163, %164, %cst_105 {dimension_numbers = #tpu.dot_dimension_numbers<[1], [0], [0], [1], [0, 0, 1, 1], [], []>} : vector<8x128xbf16>, vector<128x128xbf16>, vector<8x128xf32> -> vector<8x128xf32>
    %c0_106 = arith.constant 0 : index
    %c0_107 = arith.constant 0 : index
    %166 = vector.load %arg12[%c0_106, %c0_107] : memref<1x128xf32, #tpu.memory_space<vmem>>, vector<1x128xf32>
    %167 = vector.broadcast %166 : vector<1x128xf32> to vector<8x128xf32>
    %168 = arith.addf %165, %167 : vector<8x128xf32>
    %cst_108 = arith.constant 0.000000e+00 : f32
    %169 = vector.broadcast %cst_108 : f32 to vector<8x128xf32>
    %170 = arith.maximumf %168, %169 : vector<8x128xf32>
    %c0_109 = arith.constant 0 : index
    %c0_110 = arith.constant 0 : index
    %171 = vector.load %arg13[%c0_109, %c0_110] : memref<8x128xf32, #tpu.memory_space<vmem>>, vector<8x128xf32>
    tpu.vector_store %arg13[%c0_109, %c0_110], %170 {strides = array<i32>} : memref<8x128xf32, #tpu.memory_space<vmem>>, vector<8x128xf32>,
    return
  }
}

</mosaic_0001>

<llo_original>
// kernel: tpu_custom_call.1
$region0: #{tpu_custom_call.1}
  #allocation0 [shape = 'u32[]', space=smem, size = 0x4, offset = 0x4, fixed_abs, tag = 'smem constant byte address 0x4 - core index']
  #allocation1 [shape = 'u32[144,128]{1,0:T(1,128)}', space=vmem, size = 0x12000, scoped, tag = 'internal scratch']
  #allocation2 [shape = 'bf16[128,128]{1,0:T(16,128)(2,1)}', space=vmem, size = 0x8000, scoped, tag = 'scratch operand']
  %s0 = inlined_call_operand.hbm [shape: bf16[128,128], index: 0, kind: input, shape index: {}]
  %s1 = inlined_call_operand.hbm [shape: bf16[128,128], index: 1, kind: input, shape index: {}]
  %s2 = inlined_call_operand.vmem [shape: f32[128,1], index: 2, kind: input, shape index: {}]
  %s3 = inlined_call_operand.vmem [shape: bf16[8,128], index: 3, kind: input, shape index: {}]
  %s4 = inlined_call_operand.hbm [shape: bf16[128,128], index: 4, kind: input, shape index: {}]
  %s5 = inlined_call_operand.vmem [shape: bf16[2,128,128], index: 5, kind: input, shape index: {}]
  %s6 = inlined_call_operand.vmem [shape: f32[3,1,128], index: 6, kind: input, shape index: {}]
  %s7 = inlined_call_operand.hbm [shape: bf16[3,128,128], index: 7, kind: input, shape index: {}]
  %s8 = inlined_call_operand.vmem [shape: f32[3,1,128], index: 8, kind: input, shape index: {}]
  %s9 = inlined_call_operand.vmem [shape: f32[3,1,128], index: 9, kind: input, shape index: {}]
  %s10 = inlined_call_operand.vmem [shape: f32[3,1,128], index: 10, kind: input, shape index: {}]
  %s11 = inlined_call_operand.hbm [shape: bf16[128,128], index: 11, kind: input, shape index: {}]
  %s12 = inlined_call_operand.vmem [shape: f32[1,128], index: 12, kind: input, shape index: {}]
  %s13 = inlined_call_operand.hbm [shape: f32[8,128], index: 13, kind: output, shape index: {}]
  %s14 = sld [smem:[#allocation0]]
  $region82: #{tpu_custom_call.1} parent=0
    _
  %s16 = ssub.s32 1, %s14
  %s17 = scalar_select 0, %s16, %s14
  $region1: #{tpu_custom_call.1} parent=0
    #allocation3 [shape = 'u8[32768]{0}', space=vmem, size = 0x8000, scoped, tag = 'input window, operand 0, single buffered']
    #allocation4 [shape = 's32[1]{0}', space=sflag, size = 0x4, scoped, tag = 'scoped memory for tpu_custom_call.1']
    #allocation5 [shape = 's32[1]{0}', space=sflag, size = 0x4, scoped, tag = 'scoped memory for tpu_custom_call.1']
    #allocation6 [shape = 'u8[32768]{0}', space=vmem, size = 0x8000, scoped, tag = 'input window, operand 1, single buffered']
    #allocation7 [shape = 's32[1]{0}', space=sflag, size = 0x4, scoped, tag = 'scoped memory for tpu_custom_call.1']
    #allocation8 [shape = 'u8[32768]{0}', space=vmem, size = 0x8000, scoped, tag = 'input window, operand 4, single buffered']
    #allocation9 [shape = 'u8[98304]{0}', space=vmem, size = 0x18000, scoped, tag = 'input window, operand 7, single buffered']
    #allocation10 [shape = 's32[1]{0}', space=sflag, size = 0x4, scoped, tag = 'scoped memory for tpu_custom_call.1']
    #allocation11 [shape = 'u8[32768]{0}', space=vmem, size = 0x8000, scoped, tag = 'input window, operand 11, single buffered']
    #allocation12 [shape = 'u8[4096]{0}', space=vmem, size = 0x1000, scoped, tag = 'output window, operand 0, single buffered']
    %18 = vsyncpa [#allocation4], 0
    %19 = vsyncpa [#allocation7], 0
    %20 = vsyncpa [#allocation10], 0
    %21 = vsyncpa [#allocation5], 0
    // Predicated region
    $region2: #{tpu_custom_call.1} parent=1 // pred_check
      _
    $region3: #{tpu_custom_call.1} parent=1 // pred_check_branch
      %23 = sbr.rel (0) target = $region5
    $region4: #{tpu_custom_call.1} parent=1 // pred_region
      %s25 = ssub.s32 1024, 1024
      %26 = vsyncadd [#allocation4], %s25
      %s27 = sshll.u32 [#allocation3], 4
      %s28 = int_to_ptr.vmem [resolvable:$true] %s27
      %33 = dma.hbm_to_vmem [thread:$0]  %s0, 1024, %s28, [#allocation4], 64, 64, 4
    $region5: #{tpu_custom_call.1} parent=1 // pred_fallthru
      _
    // Predicated region
    $region6: #{tpu_custom_call.1} parent=1 // pred_check
      _
    $region7: #{tpu_custom_call.1} parent=1 // pred_check_branch
      %35 = sbr.rel (0) target = $region9
    $region8: #{tpu_custom_call.1} parent=1 // pred_region
      %s37 = ssub.s32 1024, 1024
      %38 = vsyncadd [#allocation7], %s37
      %s39 = sshll.u32 [#allocation6], 4
      %s40 = int_to_ptr.vmem [resolvable:$true] %s39
      %45 = dma.hbm_to_vmem [thread:$0]  %s1, 1024, %s40, [#allocation7], 64, 64, 4
    $region9: #{tpu_custom_call.1} parent=1 // pred_fallthru
      _
    // Predicated region
    $region10: #{tpu_custom_call.1} parent=1 // pred_check
      _
    $region11: #{tpu_custom_call.1} parent=1 // pred_check_branch
      %47 = sbr.rel (0) target = $region13
    $region12: #{tpu_custom_call.1} parent=1 // pred_region
      _
    $region13: #{tpu_custom_call.1} parent=1 // pred_fallthru
      _
    // Predicated region
    $region14: #{tpu_custom_call.1} parent=1 // pred_check
      _
    $region15: #{tpu_custom_call.1} parent=1 // pred_check_branch
      %49 = sbr.rel (0) target = $region17
    $region16: #{tpu_custom_call.1} parent=1 // pred_region
      _
    $region17: #{tpu_custom_call.1} parent=1 // pred_fallthru
      _
    // Predicated region
    $region18: #{tpu_custom_call.1} parent=1 // pred_check
      _
    $region19: #{tpu_custom_call.1} parent=1 // pred_check_branch
      %51 = sbr.rel (0) target = $region21
    $region20: #{tpu_custom_call.1} parent=1 // pred_region
      %s53 = ssub.s32 1024, 1024
      %54 = vsyncadd [#allocation7], %s53
      %s55 = sshll.u32 [#allocation8], 4
      %s56 = int_to_ptr.vmem [resolvable:$true] %s55
      %61 = dma.hbm_to_vmem [thread:$0]  %s4, 1024, %s56, [#allocation7], 64, 64, 4
    $region21: #{tpu_custom_call.1} parent=1 // pred_fallthru
      _
    // Predicated region
    $region22: #{tpu_custom_call.1} parent=1 // pred_check
      _
    $region23: #{tpu_custom_call.1} parent=1 // pred_check_branch
      %63 = sbr.rel (0) target = $region25
    $region24: #{tpu_custom_call.1} parent=1 // pred_region
      _
    $region25: #{tpu_custom_call.1} parent=1 // pred_fallthru
      _
    // Predicated region
    $region26: #{tpu_custom_call.1} parent=1 // pred_check
      _
    $region27: #{tpu_custom_call.1} parent=1 // pred_check_branch
      %65 = sbr.rel (0) target = $region29
    $region28: #{tpu_custom_call.1} parent=1 // pred_region
      _
    $region29: #{tpu_custom_call.1} parent=1 // pred_fallthru
      _
    // Predicated region
    $region30: #{tpu_custom_call.1} parent=1 // pred_check
      _
    $region31: #{tpu_custom_call.1} parent=1 // pred_check_branch
      %67 = sbr.rel (0) target = $region33
    $region32: #{tpu_custom_call.1} parent=1 // pred_region
      %s69 = ssub.s32 3072, 3072
      %70 = vsyncadd [#allocation10], %s69
      %s71 = sshll.u32 [#allocation9], 4
      %s72 = int_to_ptr.vmem [resolvable:$true] %s71
      %77 = dma.hbm_to_vmem [thread:$0]  %s7, 3072, %s72, [#allocation10], 64, 64, 4
    $region33: #{tpu_custom_call.1} parent=1 // pred_fallthru
      _
    // Predicated region
    $region34: #{tpu_custom_call.1} parent=1 // pred_check
      _
    $region35: #{tpu_custom_call.1} parent=1 // pred_check_branch
      %79 = sbr.rel (0) target = $region37
    $region36: #{tpu_custom_call.1} parent=1 // pred_region
      _
    $region37: #{tpu_custom_call.1} parent=1 // pred_fallthru
      _
    // Predicated region
    $region38: #{tpu_custom_call.1} parent=1 // pred_check
      _
    $region39: #{tpu_custom_call.1} parent=1 // pred_check_branch
      %81 = sbr.rel (0) target = $region41
    $region40: #{tpu_custom_call.1} parent=1 // pred_region
      _
    $region41: #{tpu_custom_call.1} parent=1 // pred_fallthru
      _
    // Predicated region
    $region42: #{tpu_custom_call.1} parent=1 // pred_check
      _
    $region43: #{tpu_custom_call.1} parent=1 // pred_check_branch
      %83 = sbr.rel (0) target = $region45
    $region44: #{tpu_custom_call.1} parent=1 // pred_region
      _
    $region45: #{tpu_custom_call.1} parent=1 // pred_fallthru
      _
    // Predicated region
    $region46: #{tpu_custom_call.1} parent=1 // pred_check
      _
    $region47: #{tpu_custom_call.1} parent=1 // pred_check_branch
      %85 = sbr.rel (0) target = $region49
    $region48: #{tpu_custom_call.1} parent=1 // pred_region
      %s87 = ssub.s32 1024, 1024
      %88 = vsyncadd [#allocation10], %s87
      %s89 = sshll.u32 [#allocation11], 4
      %s90 = int_to_ptr.vmem [resolvable:$true] %s89
      %95 = dma.hbm_to_vmem [thread:$0]  %s11, 1024, %s90, [#allocation10], 64, 64, 4
    $region49: #{tpu_custom_call.1} parent=1 // pred_fallthru
      _
    // Predicated region
    $region50: #{tpu_custom_call.1} parent=1 // pred_check
      _
    $region51: #{tpu_custom_call.1} parent=1 // pred_check_branch
      %97 = sbr.rel (0) target = $region53
    $region52: #{tpu_custom_call.1} parent=1 // pred_region
      _
    $region53: #{tpu_custom_call.1} parent=1 // pred_fallthru
      _
    // Predicated region
    $region54: #{tpu_custom_call.1} parent=1 // pred_check
      _
    $region55: #{tpu_custom_call.1} parent=1 // pred_check_branch
      %99 = sbr.rel (0) target = $region57
    $region56: #{tpu_custom_call.1} parent=1 // pred_region
      %100 = dma.done [#allocation4], 1024
    $region57: #{tpu_custom_call.1} parent=1 // pred_fallthru
      _
    // Predicated region
    $region58: #{tpu_custom_call.1} parent=1 // pred_check
      _
    $region59: #{tpu_custom_call.1} parent=1 // pred_check_branch
      %102 = sbr.rel (0) target = $region61
    $region60: #{tpu_custom_call.1} parent=1 // pred_region
      %103 = dma.done [#allocation7], 1024
    $region61: #{tpu_custom_call.1} parent=1 // pred_fallthru
      _
    // Predicated region
    $region62: #{tpu_custom_call.1} parent=1 // pred_check
      _
    $region63: #{tpu_custom_call.1} parent=1 // pred_check_branch
      %105 = sbr.rel (0) target = $region65
    $region64: #{tpu_custom_call.1} parent=1 // pred_region
      %106 = dma.done [#allocation7], 1024
    $region65: #{tpu_custom_call.1} parent=1 // pred_fallthru
      _
    // Predicated region
    $region66: #{tpu_custom_call.1} parent=1 // pred_check
      _
    $region67: #{tpu_custom_call.1} parent=1 // pred_check_branch
      %108 = sbr.rel (0) target = $region69
    $region68: #{tpu_custom_call.1} parent=1 // pred_region
      %109 = dma.done [#allocation10], 3072
    $region69: #{tpu_custom_call.1} parent=1 // pred_fallthru
      _
    // Predicated region
    $region70: #{tpu_custom_call.1} parent=1 // pred_check
      _
    $region71: #{tpu_custom_call.1} parent=1 // pred_check_branch
      %111 = sbr.rel (0) target = $region73
    $region72: #{tpu_custom_call.1} parent=1 // pred_region
      %112 = dma.done [#allocation10], 1024
    $region73: #{tpu_custom_call.1} parent=1 // pred_fallthru
      _
    %v114 = vld [vmem:[%s2] sm:$0xff]
    %v115 = vld [vmem:[%s2 + $0x8] sm:$0xff]
    %v116 = vld [vmem:[%s2 + $0x10] sm:$0xff]
    %v117 = vld [vmem:[%s2 + $0x18] sm:$0xff]
    %v118 = vld [vmem:[%s2 + $0x20] sm:$0xff]
    %v119 = vld [vmem:[%s2 + $0x28] sm:$0xff]
    %v120 = vld [vmem:[%s2 + $0x30] sm:$0xff]
    %v121 = vld [vmem:[%s2 + $0x38] sm:$0xff]
    %v122 = vld [vmem:[%s2 + $0x40] sm:$0xff]
    %v123 = vld [vmem:[%s2 + $0x48] sm:$0xff]
    %v124 = vld [vmem:[%s2 + $0x50] sm:$0xff]
    %v125 = vld [vmem:[%s2 + $0x58] sm:$0xff]
    %v126 = vld [vmem:[%s2 + $0x60] sm:$0xff]
    %v127 = vld [vmem:[%s2 + $0x68] sm:$0xff]
    %v128 = vld [vmem:[%s2 + $0x70] sm:$0xff]
    %v129 = vld [vmem:[%s2 + $0x78] sm:$0xff]
    %v130 = vld [vmem:[#allocation3] sm:$0xf]
    %v131 = vld [vmem:[#allocation3 + $0x4] sm:$0xf]
    %v132 = vld [vmem:[#allocation3 + $0x8] sm:$0xf]
    %v133 = vld [vmem:[#allocation3 + $0xc] sm:$0xf]
    %v134 = vld [vmem:[#allocation3 + $0x10] sm:$0xf]
    %v135 = vld [vmem:[#allocation3 + $0x14] sm:$0xf]
    %v136 = vld [vmem:[#allocation3 + $0x18] sm:$0xf]
    %v137 = vld [vmem:[#allocation3 + $0x1c] sm:$0xf]
    %v138 = vld [vmem:[#allocation3 + $0x20] sm:$0xf]
    %v139 = vld [vmem:[#allocation3 + $0x24] sm:$0xf]
    %v140 = vld [vmem:[#allocation3 + $0x28] sm:$0xf]
    %v141 = vld [vmem:[#allocation3 + $0x2c] sm:$0xf]
    %v142 = vld [vmem:[#allocation3 + $0x30] sm:$0xf]
    %v143 = vld [vmem:[#allocation3 + $0x34] sm:$0xf]
    %v144 = vld [vmem:[#allocation3 + $0x38] sm:$0xf]
    %v145 = vld [vmem:[#allocation3 + $0x3c] sm:$0xf]
    %v146 = vld [vmem:[#allocation6] sm:$0xf]
    %v147 = vld [vmem:[#allocation6 + $0x4] sm:$0xf]
    %v148 = vld [vmem:[#allocation6 + $0x8] sm:$0xf]
    %v149 = vld [vmem:[#allocation6 + $0xc] sm:$0xf]
    %v150 = vld [vmem:[#allocation6 + $0x10] sm:$0xf]
    %v151 = vld [vmem:[#allocation6 + $0x14] sm:$0xf]
    %v152 = vld [vmem:[#allocation6 + $0x18] sm:$0xf]
    %v153 = vld [vmem:[#allocation6 + $0x1c] sm:$0xf]
    %v154 = vld [vmem:[#allocation6 + $0x20] sm:$0xf]
    %v155 = vld [vmem:[#allocation6 + $0x24] sm:$0xf]
    %v156 = vld [vmem:[#allocation6 + $0x28] sm:$0xf]
    %v157 = vld [vmem:[#allocation6 + $0x2c] sm:$0xf]
    %v158 = vld [vmem:[#allocation6 + $0x30] sm:$0xf]
    %v159 = vld [vmem:[#allocation6 + $0x34] sm:$0xf]
    %v160 = vld [vmem:[#allocation6 + $0x38] sm:$0xf]
    %v161 = vld [vmem:[#allocation6 + $0x3c] sm:$0xf]
    %v162 = vld [vmem:[#allocation8] sm:$0xf]
    %v163 = vld [vmem:[#allocation8 + $0x4] sm:$0xf]
    %v164 = vld [vmem:[#allocation8 + $0x8] sm:$0xf]
    %v165 = vld [vmem:[#allocation8 + $0xc] sm:$0xf]
    %v166 = vld [vmem:[#allocation8 + $0x10] sm:$0xf]
    %v167 = vld [vmem:[#allocation8 + $0x14] sm:$0xf]
    %v168 = vld [vmem:[#allocation8 + $0x18] sm:$0xf]
    %v169 = vld [vmem:[#allocation8 + $0x1c] sm:$0xf]
    %v170 = vld [vmem:[#allocation8 + $0x20] sm:$0xf]
    %v171 = vld [vmem:[#allocation8 + $0x24] sm:$0xf]
    %v172 = vld [vmem:[#allocation8 + $0x28] sm:$0xf]
    %v173 = vld [vmem:[#allocation8 + $0x2c] sm:$0xf]
    %v174 = vld [vmem:[#allocation8 + $0x30] sm:$0xf]
    %v175 = vld [vmem:[#allocation8 + $0x34] sm:$0xf]
    %v176 = vld [vmem:[#allocation8 + $0x38] sm:$0xf]
    %v177 = vld [vmem:[#allocation8 + $0x3c] sm:$0xf]
    %v194 = vunpack.c.l.b16 %v130
    %v195 = vunpack.c.l.b16 %v131
    %v196 = vunpack.c.l.b16 %v132
    %v197 = vunpack.c.l.b16 %v133
    %v198 = vunpack.c.l.b16 %v134
    %v199 = vunpack.c.l.b16 %v135
    %v200 = vunpack.c.l.b16 %v136
    %v201 = vunpack.c.l.b16 %v137
    %v202 = vunpack.c.l.b16 %v138
    %v203 = vunpack.c.l.b16 %v139
    %v204 = vunpack.c.l.b16 %v140
    %v205 = vunpack.c.l.b16 %v141
    %v206 = vunpack.c.l.b16 %v142
    %v207 = vunpack.c.l.b16 %v143
    %v208 = vunpack.c.l.b16 %v144
    %v209 = vunpack.c.l.b16 %v145
    %v210 = vpack.c.b16 %v195, %v194
    %v211 = vpack.c.b16 %v197, %v196
    %v212 = vpack.c.b16 %v199, %v198
    %v213 = vpack.c.b16 %v201, %v200
    %v214 = vpack.c.b16 %v203, %v202
    %v215 = vpack.c.b16 %v205, %v204
    %v216 = vpack.c.b16 %v207, %v206
    %v217 = vpack.c.b16 %v209, %v208
    %v242 = vunpack.c.l.b16 %v146
    %v243 = vunpack.c.l.b16 %v147
    %v244 = vunpack.c.l.b16 %v148
    %v245 = vunpack.c.l.b16 %v149
    %v246 = vunpack.c.l.b16 %v150
    %v247 = vunpack.c.l.b16 %v151
    %v248 = vunpack.c.l.b16 %v152
    %v249 = vunpack.c.l.b16 %v153
    %v250 = vunpack.c.l.b16 %v154
    %v251 = vunpack.c.l.b16 %v155
    %v252 = vunpack.c.l.b16 %v156
    %v253 = vunpack.c.l.b16 %v157
    %v254 = vunpack.c.l.b16 %v158
    %v255 = vunpack.c.l.b16 %v159
    %v256 = vunpack.c.l.b16 %v160
    %v257 = vunpack.c.l.b16 %v161
    %v258 = vpack.c.b16 %v243, %v242
    %v259 = vpack.c.b16 %v245, %v244
    %v260 = vpack.c.b16 %v247, %v246
    %v261 = vpack.c.b16 %v249, %v248
    %v262 = vpack.c.b16 %v251, %v250
    %v263 = vpack.c.b16 %v253, %v252
    %v264 = vpack.c.b16 %v255, %v254
    %v265 = vpack.c.b16 %v257, %v256
    %274 = vmatprep.subr.bf16.mxu0 0
    %275 = vmatpush1.bf16.msra.mxu0 %v258
    %276 = vmatprep.subr.bf16.mxu0 0
    %277 = vmatpush1.bf16.msra.mxu0 %v259
    %278 = vmatprep.subr.bf16.mxu0 0
    %279 = vmatpush1.bf16.msra.mxu0 %v260
    %280 = vmatprep.subr.bf16.mxu0 0
    %281 = vmatpush1.bf16.msra.mxu0 %v261
    %282 = vmatprep.subr.bf16.mxu0 0
    %283 = vmatpush1.bf16.msra.mxu0 %v262
    %284 = vmatprep.subr.bf16.mxu0 0
    %285 = vmatpush1.bf16.msra.mxu0 %v263
    %286 = vmatprep.subr.bf16.mxu0 0
    %287 = vmatpush1.bf16.msra.mxu0 %v264
    %288 = vmatprep.subr.bf16.mxu0 0
    %289 = vmatpush1.bf16.msra.mxu0 %v265
    %290 = vmatprep.subr.bf16.mxu0 0
    %291 = vmatpush1.bf16.msra.mxu0 0
    %292 = vmatprep.subr.bf16.mxu0 0
    %293 = vmatpush1.bf16.msra.mxu0 0
    %294 = vmatprep.subr.bf16.mxu0 0
    %295 = vmatpush1.bf16.msra.mxu0 0
    %296 = vmatprep.subr.bf16.mxu0 0
    %297 = vmatpush1.bf16.msra.mxu0 0
    %298 = vmatprep.subr.bf16.mxu0 0
    %299 = vmatpush1.bf16.msra.mxu0 0
    %300 = vmatprep.subr.bf16.mxu0 0
    %301 = vmatpush1.bf16.msra.mxu0 0
    %302 = vmatprep.subr.bf16.mxu0 0
    %303 = vmatpush1.bf16.msra.mxu0 0
    %304 = vmatprep.subr.bf16.mxu0 0
    %305 = vmatpush1.bf16.msra.mxu0 0
    %306 = vmatprep.mubr.bf16.mxu0 0
    %307 = vmatmul.mubr.bf16.gmra.mrb[0].mxu0 %v210
    %v308 = vpop.f32.mrb[0].mxu0
    %v309 = vadd.f32 0.0, %v308
    %v310 = vpop.f32.mrb[0].mxu0
    %v311 = vpop.f32.mrb[0].mxu0
    %v312 = vadd.f32 0.0, %v311
    %v313 = vpop.f32.mrb[0].mxu0
    %314 = vmatprep.mubr.bf16.mxu0 0
    %315 = vmatmul.mubr.bf16.gmra.mrb[0].mxu0 %v211
    %v316 = vpop.f32.mrb[0].mxu0
    %v317 = vadd.f32 0.0, %v316
    %v318 = vpop.f32.mrb[0].mxu0
    %v319 = vpop.f32.mrb[0].mxu0
    %v320 = vadd.f32 0.0, %v319
    %v321 = vpop.f32.mrb[0].mxu0
    %322 = vmatprep.mubr.bf16.mxu0 0
    %323 = vmatmul.mubr.bf16.gmra.mrb[0].mxu0 %v212
    %v324 = vpop.f32.mrb[0].mxu0
    %v325 = vadd.f32 0.0, %v324
    %v326 = vpop.f32.mrb[0].mxu0
    %v327 = vpop.f32.mrb[0].mxu0
    %v328 = vadd.f32 0.0, %v327
    %v329 = vpop.f32.mrb[0].mxu0
    %330 = vmatprep.mubr.bf16.mxu0 0
    %331 = vmatmul.mubr.bf16.gmra.mrb[0].mxu0 %v213
    %v332 = vpop.f32.mrb[0].mxu0
    %v333 = vadd.f32 0.0, %v332
    %v334 = vpop.f32.mrb[0].mxu0
    %v335 = vpop.f32.mrb[0].mxu0
    %v336 = vadd.f32 0.0, %v335
    %v337 = vpop.f32.mrb[0].mxu0
    %338 = vmatprep.mubr.bf16.mxu0 0
    %339 = vmatmul.mubr.bf16.gmra.mrb[0].mxu0 %v214
    %v340 = vpop.f32.mrb[0].mxu0
    %v341 = vadd.f32 0.0, %v340
    %v342 = vpop.f32.mrb[0].mxu0
    %v343 = vpop.f32.mrb[0].mxu0
    %v344 = vadd.f32 0.0, %v343
    %v345 = vpop.f32.mrb[0].mxu0
    %346 = vmatprep.mubr.bf16.mxu0 0
    %347 = vmatmul.mubr.bf16.gmra.mrb[0].mxu0 %v215
    %v348 = vpop.f32.mrb[0].mxu0
    %v349 = vadd.f32 0.0, %v348
    %v350 = vpop.f32.mrb[0].mxu0
    %v351 = vpop.f32.mrb[0].mxu0
    %v352 = vadd.f32 0.0, %v351
    %v353 = vpop.f32.mrb[0].mxu0
    %354 = vmatprep.mubr.bf16.mxu0 0
    %355 = vmatmul.mubr.bf16.gmra.mrb[0].mxu0 %v216
    %v356 = vpop.f32.mrb[0].mxu0
    %v357 = vadd.f32 0.0, %v356
    %v358 = vpop.f32.mrb[0].mxu0
    %v359 = vpop.f32.mrb[0].mxu0
    %v360 = vadd.f32 0.0, %v359
    %v361 = vpop.f32.mrb[0].mxu0
    %362 = vmatprep.mubr.bf16.mxu0 0
    %363 = vmatmul.mubr.bf16.gmra.mrb[0].mxu0 %v217
    %v364 = vpop.f32.mrb[0].mxu0
    %v365 = vadd.f32 0.0, %v364
    %v366 = vpop.f32.mrb[0].mxu0
    %v367 = vpop.f32.mrb[0].mxu0
    %v368 = vadd.f32 0.0, %v367
    %v369 = vpop.f32.mrb[0].mxu0
    %370 = vdwg.mxu0
    %v371 = vpack.c.bf16 %v312, %v309
    %v372 = vpack.c.bf16 %v320, %v317
    %v373 = vpack.c.bf16 %v328, %v325
    %v374 = vpack.c.bf16 %v336, %v333
    %v375 = vpack.c.bf16 %v344, %v341
    %v376 = vpack.c.bf16 %v352, %v349
    %v377 = vpack.c.bf16 %v360, %v357
    %v378 = vpack.c.bf16 %v368, %v365
    %v379 = vld [vmem:[%s6] sm:$0x1]
    %v381 = vlaneseq
    %v382 = vshrl.u32 %v381, 7
    %v383 = vsub.s32 0, %v382
    %v384 = vrot.slane %v379, %v383
    %v402 = vunpack.c.l.b16 %v162
    %v403 = vunpack.c.l.b16 %v163
    %v404 = vunpack.c.l.b16 %v164
    %v405 = vunpack.c.l.b16 %v165
    %v406 = vunpack.c.l.b16 %v166
    %v407 = vunpack.c.l.b16 %v167
    %v408 = vunpack.c.l.b16 %v168
    %v409 = vunpack.c.l.b16 %v169
    %v410 = vunpack.c.l.b16 %v170
    %v411 = vunpack.c.l.b16 %v171
    %v412 = vunpack.c.l.b16 %v172
    %v413 = vunpack.c.l.b16 %v173
    %v414 = vunpack.c.l.b16 %v174
    %v415 = vunpack.c.l.b16 %v175
    %v416 = vunpack.c.l.b16 %v176
    %v417 = vunpack.c.l.b16 %v177
    %v418 = vpack.c.b16 %v403, %v402
    %v419 = vpack.c.b16 %v405, %v404
    %v420 = vpack.c.b16 %v407, %v406
    %v421 = vpack.c.b16 %v409, %v408
    %v422 = vpack.c.b16 %v411, %v410
    %v423 = vpack.c.b16 %v413, %v412
    %v424 = vpack.c.b16 %v415, %v414
    %v425 = vpack.c.b16 %v417, %v416
    %434 = vmatprep.subr.bf16.mxu0 0
    %435 = vmatpush1.bf16.msra.mxu0 %v418
    %436 = vmatprep.subr.bf16.mxu0 0
    %437 = vmatpush1.bf16.msra.mxu0 %v419
    %438 = vmatprep.subr.bf16.mxu0 0
    %439 = vmatpush1.bf16.msra.mxu0 %v420
    %440 = vmatprep.subr.bf16.mxu0 0
    %441 = vmatpush1.bf16.msra.mxu0 %v421
    %442 = vmatprep.subr.bf16.mxu0 0
    %443 = vmatpush1.bf16.msra.mxu0 %v422
    %444 = vmatprep.subr.bf16.mxu0 0
    %445 = vmatpush1.bf16.msra.mxu0 %v423
    %446 = vmatprep.subr.bf16.mxu0 0
    %447 = vmatpush1.bf16.msra.mxu0 %v424
    %448 = vmatprep.subr.bf16.mxu0 0
    %449 = vmatpush1.bf16.msra.mxu0 %v425
    %450 = vmatprep.subr.bf16.mxu0 0
    %451 = vmatpush1.bf16.msra.mxu0 0
    %452 = vmatprep.subr.bf16.mxu0 0
    %453 = vmatpush1.bf16.msra.mxu0 0
    %454 = vmatprep.subr.bf16.mxu0 0
    %455 = vmatpush1.bf16.msra.mxu0 0
    %456 = vmatprep.subr.bf16.mxu0 0
    %457 = vmatpush1.bf16.msra.mxu0 0
    %458 = vmatprep.subr.bf16.mxu0 0
    %459 = vmatpush1.bf16.msra.mxu0 0
    %460 = vmatprep.subr.bf16.mxu0 0
    %461 = vmatpush1.bf16.msra.mxu0 0
    %462 = vmatprep.subr.bf16.mxu0 0
    %463 = vmatpush1.bf16.msra.mxu0 0
    %464 = vmatprep.subr.bf16.mxu0 0
    %465 = vmatpush1.bf16.msra.mxu0 0
    %466 = vmatprep.mubr.bf16.mxu0 0
    %467 = vmatmul.mubr.bf16.gmra.mrb[0].mxu0 %v371
    %v468 = vpop.f32.mrb[0].mxu0
    %v469 = vadd.f32 %v384, %v468
    %v470 = vpop.f32.mrb[0].mxu0
    %v471 = vpop.f32.mrb[0].mxu0
    %v472 = vadd.f32 %v384, %v471
    %v473 = vpop.f32.mrb[0].mxu0
    %474 = vmatprep.mubr.bf16.mxu0 0
    %475 = vmatmul.mubr.bf16.gmra.mrb[0].mxu0 %v372
    %v476 = vpop.f32.mrb[0].mxu0
    %v477 = vadd.f32 %v384, %v476
    %v478 = vpop.f32.mrb[0].mxu0
    %v479 = vpop.f32.mrb[0].mxu0
    %v480 = vadd.f32 %v384, %v479
    %v481 = vpop.f32.mrb[0].mxu0
    %482 = vmatprep.mubr.bf16.mxu0 0
    %483 = vmatmul.mubr.bf16.gmra.mrb[0].mxu0 %v373
    %v484 = vpop.f32.mrb[0].mxu0
    %v485 = vadd.f32 %v384, %v484
    %v486 = vpop.f32.mrb[0].mxu0
    %v487 = vpop.f32.mrb[0].mxu0
    %v488 = vadd.f32 %v384, %v487
    %v489 = vpop.f32.mrb[0].mxu0
    %490 = vmatprep.mubr.bf16.mxu0 0
    %491 = vmatmul.mubr.bf16.gmra.mrb[0].mxu0 %v374
    %v492 = vpop.f32.mrb[0].mxu0
    %v493 = vadd.f32 %v384, %v492
    %v494 = vpop.f32.mrb[0].mxu0
    %v495 = vpop.f32.mrb[0].mxu0
    %v496 = vadd.f32 %v384, %v495
    %v497 = vpop.f32.mrb[0].mxu0
    %498 = vmatprep.mubr.bf16.mxu0 0
    %499 = vmatmul.mubr.bf16.gmra.mrb[0].mxu0 %v375
    %v500 = vpop.f32.mrb[0].mxu0
    %v501 = vadd.f32 %v384, %v500
    %v502 = vpop.f32.mrb[0].mxu0
    %v503 = vpop.f32.mrb[0].mxu0
    %v504 = vadd.f32 %v384, %v503
    %v505 = vpop.f32.mrb[0].mxu0
    %506 = vmatprep.mubr.bf16.mxu0 0
    %507 = vmatmul.mubr.bf16.gmra.mrb[0].mxu0 %v376
    %v508 = vpop.f32.mrb[0].mxu0
    %v509 = vadd.f32 %v384, %v508
    %v510 = vpop.f32.mrb[0].mxu0
    %v511 = vpop.f32.mrb[0].mxu0
    %v512 = vadd.f32 %v384, %v511
    %v513 = vpop.f32.mrb[0].mxu0
    %514 = vmatprep.mubr.bf16.mxu0 0
    %515 = vmatmul.mubr.bf16.gmra.mrb[0].mxu0 %v377
    %v516 = vpop.f32.mrb[0].mxu0
    %v517 = vadd.f32 %v384, %v516
    %v518 = vpop.f32.mrb[0].mxu0
    %v519 = vpop.f32.mrb[0].mxu0
    %v520 = vadd.f32 %v384, %v519
    %v521 = vpop.f32.mrb[0].mxu0
    %522 = vmatprep.mubr.bf16.mxu0 0
    %523 = vmatmul.mubr.bf16.gmra.mrb[0].mxu0 %v378
    %v524 = vpop.f32.mrb[0].mxu0
    %v525 = vadd.f32 %v384, %v524
    %v526 = vpop.f32.mrb[0].mxu0
    %v527 = vpop.f32.mrb[0].mxu0
    %v528 = vadd.f32 %v384, %v527
    %v529 = vpop.f32.mrb[0].mxu0
    %530 = vdwg.mxu0
    %v531 = vmax.f32 %v469, 0.0
    %v532 = vmax.f32 %v472, 0.0
    %v533 = vmax.f32 %v477, 0.0
    %v534 = vmax.f32 %v480, 0.0
    %v535 = vmax.f32 %v485, 0.0
    %v536 = vmax.f32 %v488, 0.0
    %v537 = vmax.f32 %v493, 0.0
    %v538 = vmax.f32 %v496, 0.0
    %v539 = vmax.f32 %v501, 0.0
    %v540 = vmax.f32 %v504, 0.0
    %v541 = vmax.f32 %v509, 0.0
    %v542 = vmax.f32 %v512, 0.0
    %v543 = vmax.f32 %v517, 0.0
    %v544 = vmax.f32 %v520, 0.0
    %v545 = vmax.f32 %v525, 0.0
    %v546 = vmax.f32 %v528, 0.0
    %v547 = vpack.c.bf16 %v532, %v531
    %v548 = vpack.c.bf16 %v534, %v533
    %v549 = vpack.c.bf16 %v536, %v535
    %v550 = vpack.c.bf16 %v538, %v537
    %v551 = vpack.c.bf16 %v540, %v539
    %v552 = vpack.c.bf16 %v542, %v541
    %v553 = vpack.c.bf16 %v544, %v543
    %v554 = vpack.c.bf16 %v546, %v545
    %v555 = vld [vmem:[#allocation9] sm:$0xf]
    %v556 = vld [vmem:[#allocation9 + $0x4] sm:$0xf]
    %v557 = vld [vmem:[#allocation9 + $0x8] sm:$0xf]
    %v558 = vld [vmem:[#allocation9 + $0xc] sm:$0xf]
    %v559 = vld [vmem:[#allocation9 + $0x10] sm:$0xf]
    %v560 = vld [vmem:[#allocation9 + $0x14] sm:$0xf]
    %v561 = vld [vmem:[#allocation9 + $0x18] sm:$0xf]
    %v562 = vld [vmem:[#allocation9 + $0x1c] sm:$0xf]
    %v563 = vld [vmem:[#allocation9 + $0x20] sm:$0xf]
    %v564 = vld [vmem:[#allocation9 + $0x24] sm:$0xf]
    %v565 = vld [vmem:[#allocation9 + $0x28] sm:$0xf]
    %v566 = vld [vmem:[#allocation9 + $0x2c] sm:$0xf]
    %v567 = vld [vmem:[#allocation9 + $0x30] sm:$0xf]
    %v568 = vld [vmem:[#allocation9 + $0x34] sm:$0xf]
    %v569 = vld [vmem:[#allocation9 + $0x38] sm:$0xf]
    %v570 = vld [vmem:[#allocation9 + $0x3c] sm:$0xf]
    %v571 = vld [vmem:[%s8] sm:$0x1]
    %v573 = vlaneseq
    %v574 = vshrl.u32 %v573, 7
    %v575 = vsub.s32 0, %v574
    %v576 = vrot.slane %v571, %v575
    %v594 = vunpack.c.l.b16 %v555
    %v595 = vunpack.c.l.b16 %v556
    %v596 = vunpack.c.l.b16 %v557
    %v597 = vunpack.c.l.b16 %v558
    %v598 = vunpack.c.l.b16 %v559
    %v599 = vunpack.c.l.b16 %v560
    %v600 = vunpack.c.l.b16 %v561
    %v601 = vunpack.c.l.b16 %v562
    %v602 = vunpack.c.l.b16 %v563
    %v603 = vunpack.c.l.b16 %v564
    %v604 = vunpack.c.l.b16 %v565
    %v605 = vunpack.c.l.b16 %v566
    %v606 = vunpack.c.l.b16 %v567
    %v607 = vunpack.c.l.b16 %v568
    %v608 = vunpack.c.l.b16 %v569
    %v609 = vunpack.c.l.b16 %v570
    %v610 = vpack.c.b16 %v595, %v594
    %v611 = vpack.c.b16 %v597, %v596
    %v612 = vpack.c.b16 %v599, %v598
    %v613 = vpack.c.b16 %v601, %v600
    %v614 = vpack.c.b16 %v603, %v602
    %v615 = vpack.c.b16 %v605, %v604
    %v616 = vpack.c.b16 %v607, %v606
    %v617 = vpack.c.b16 %v609, %v608
    %626 = vmatprep.subr.bf16.mxu0 0
    %627 = vmatpush1.bf16.msra.mxu0 %v610
    %628 = vmatprep.subr.bf16.mxu0 0
    %629 = vmatpush1.bf16.msra.mxu0 %v611
    %630 = vmatprep.subr.bf16.mxu0 0
    %631 = vmatpush1.bf16.msra.mxu0 %v612
    %632 = vmatprep.subr.bf16.mxu0 0
    %633 = vmatpush1.bf16.msra.mxu0 %v613
    %634 = vmatprep.subr.bf16.mxu0 0
    %635 = vmatpush1.bf16.msra.mxu0 %v614
    %636 = vmatprep.subr.bf16.mxu0 0
    %637 = vmatpush1.bf16.msra.mxu0 %v615
    %638 = vmatprep.subr.bf16.mxu0 0
    %639 = vmatpush1.bf16.msra.mxu0 %v616
    %640 = vmatprep.subr.bf16.mxu0 0
    %641 = vmatpush1.bf16.msra.mxu0 %v617
    %642 = vmatprep.subr.bf16.mxu0 0
    %643 = vmatpush1.bf16.msra.mxu0 0
    %644 = vmatprep.subr.bf16.mxu0 0
    %645 = vmatpush1.bf16.msra.mxu0 0
    %646 = vmatprep.subr.bf16.mxu0 0
    %647 = vmatpush1.bf16.msra.mxu0 0
    %648 = vmatprep.subr.bf16.mxu0 0
    %649 = vmatpush1.bf16.msra.mxu0 0
    %650 = vmatprep.subr.bf16.mxu0 0
    %651 = vmatpush1.bf16.msra.mxu0 0
    %652 = vmatprep.subr.bf16.mxu0 0
    %653 = vmatpush1.bf16.msra.mxu0 0
    %654 = vmatprep.subr.bf16.mxu0 0
    %655 = vmatpush1.bf16.msra.mxu0 0
    %656 = vmatprep.subr.bf16.mxu0 0
    %657 = vmatpush1.bf16.msra.mxu0 0
    %658 = vmatprep.mubr.bf16.mxu0 0
    %659 = vmatmul.mubr.bf16.gmra.mrb[0].mxu0 %v547
    %v660 = vpop.f32.mrb[0].mxu0
    %v661 = vadd.f32 %v576, %v660
    %v662 = vpop.f32.mrb[0].mxu0
    %v663 = vpop.f32.mrb[0].mxu0
    %v664 = vadd.f32 %v576, %v663
    %v665 = vpop.f32.mrb[0].mxu0
    %666 = vmatprep.mubr.bf16.mxu0 0
    %667 = vmatmul.mubr.bf16.gmra.mrb[0].mxu0 %v548
    %v668 = vpop.f32.mrb[0].mxu0
    %v669 = vadd.f32 %v576, %v668
    %v670 = vpop.f32.mrb[0].mxu0
    %v671 = vpop.f32.mrb[0].mxu0
    %v672 = vadd.f32 %v576, %v671
    %v673 = vpop.f32.mrb[0].mxu0
    %674 = vmatprep.mubr.bf16.mxu0 0
    %675 = vmatmul.mubr.bf16.gmra.mrb[0].mxu0 %v549
    %v676 = vpop.f32.mrb[0].mxu0
    %v677 = vadd.f32 %v576, %v676
    %v678 = vpop.f32.mrb[0].mxu0
    %v679 = vpop.f32.mrb[0].mxu0
    %v680 = vadd.f32 %v576, %v679
    %v681 = vpop.f32.mrb[0].mxu0
    %682 = vmatprep.mubr.bf16.mxu0 0
    %683 = vmatmul.mubr.bf16.gmra.mrb[0].mxu0 %v550
    %v684 = vpop.f32.mrb[0].mxu0
    %v685 = vadd.f32 %v576, %v684
    %v686 = vpop.f32.mrb[0].mxu0
    %v687 = vpop.f32.mrb[0].mxu0
    %v688 = vadd.f32 %v576, %v687
    %v689 = vpop.f32.mrb[0].mxu0
    %690 = vmatprep.mubr.bf16.mxu0 0
    %691 = vmatmul.mubr.bf16.gmra.mrb[0].mxu0 %v551
    %v692 = vpop.f32.mrb[0].mxu0
    %v693 = vadd.f32 %v576, %v692
    %v694 = vpop.f32.mrb[0].mxu0
    %v695 = vpop.f32.mrb[0].mxu0
    %v696 = vadd.f32 %v576, %v695
    %v697 = vpop.f32.mrb[0].mxu0
    %698 = vmatprep.mubr.bf16.mxu0 0
    %699 = vmatmul.mubr.bf16.gmra.mrb[0].mxu0 %v552
    %v700 = vpop.f32.mrb[0].mxu0
    %v701 = vadd.f32 %v576, %v700
    %v702 = vpop.f32.mrb[0].mxu0
    %v703 = vpop.f32.mrb[0].mxu0
    %v704 = vadd.f32 %v576, %v703
    %v705 = vpop.f32.mrb[0].mxu0
    %706 = vmatprep.mubr.bf16.mxu0 0
    %707 = vmatmul.mubr.bf16.gmra.mrb[0].mxu0 %v553
    %v708 = vpop.f32.mrb[0].mxu0
    %v709 = vadd.f32 %v576, %v708
    %v710 = vpop.f32.mrb[0].mxu0
    %v711 = vpop.f32.mrb[0].mxu0
    %v712 = vadd.f32 %v576, %v711
    %v713 = vpop.f32.mrb[0].mxu0
    %714 = vmatprep.mubr.bf16.mxu0 0
    %715 = vmatmul.mubr.bf16.gmra.mrb[0].mxu0 %v554
    %v716 = vpop.f32.mrb[0].mxu0
    %v717 = vadd.f32 %v576, %v716
    %v718 = vpop.f32.mrb[0].mxu0
    %v719 = vpop.f32.mrb[0].mxu0
    %v720 = vadd.f32 %v576, %v719
    %v721 = vpop.f32.mrb[0].mxu0
    %722 = vdwg.mxu0
    %v723 = vmax.f32 %v661, 0.0
    %v724 = vmax.f32 %v664, 0.0
    %v725 = vmax.f32 %v669, 0.0
    %v726 = vmax.f32 %v672, 0.0
    %v727 = vmax.f32 %v677, 0.0
    %v728 = vmax.f32 %v680, 0.0
    %v729 = vmax.f32 %v685, 0.0
    %v730 = vmax.f32 %v688, 0.0
    %v731 = vmax.f32 %v693, 0.0
    %v732 = vmax.f32 %v696, 0.0
    %v733 = vmax.f32 %v701, 0.0
    %v734 = vmax.f32 %v704, 0.0
    %v735 = vmax.f32 %v709, 0.0
    %v736 = vmax.f32 %v712, 0.0
    %v737 = vmax.f32 %v717, 0.0
    %v738 = vmax.f32 %v720, 0.0
    %740 = vset.pattern.permute.xlu0 0
    %741 = vperm.xlu0 %740, %v114
    %v742 = vpop.permute.xlu0 %741
    %745 = vset.pattern.permute.xlu0 0
    %746 = vperm.xlu0 %745, %v115
    %v747 = vpop.permute.xlu0 %746
    %750 = vset.pattern.permute.xlu0 0
    %751 = vperm.xlu0 %750, %v116
    %v752 = vpop.permute.xlu0 %751
    %755 = vset.pattern.permute.xlu0 0
    %756 = vperm.xlu0 %755, %v117
    %v757 = vpop.permute.xlu0 %756
    %760 = vset.pattern.permute.xlu0 0
    %761 = vperm.xlu0 %760, %v118
    %v762 = vpop.permute.xlu0 %761
    %765 = vset.pattern.permute.xlu0 0
    %766 = vperm.xlu0 %765, %v119
    %v767 = vpop.permute.xlu0 %766
    %770 = vset.pattern.permute.xlu0 0
    %771 = vperm.xlu0 %770, %v120
    %v772 = vpop.permute.xlu0 %771
    %775 = vset.pattern.permute.xlu0 0
    %776 = vperm.xlu0 %775, %v121
    %v777 = vpop.permute.xlu0 %776
    %780 = vset.pattern.permute.xlu0 0
    %781 = vperm.xlu0 %780, %v122
    %v782 = vpop.permute.xlu0 %781
    %785 = vset.pattern.permute.xlu0 0
    %786 = vperm.xlu0 %785, %v123
    %v787 = vpop.permute.xlu0 %786
    %790 = vset.pattern.permute.xlu0 0
    %791 = vperm.xlu0 %790, %v124
    %v792 = vpop.permute.xlu0 %791
    %795 = vset.pattern.permute.xlu0 0
    %796 = vperm.xlu0 %795, %v125
    %v797 = vpop.permute.xlu0 %796
    %800 = vset.pattern.permute.xlu0 0
    %801 = vperm.xlu0 %800, %v126
    %v802 = vpop.permute.xlu0 %801
    %805 = vset.pattern.permute.xlu0 0
    %806 = vperm.xlu0 %805, %v127
    %v807 = vpop.permute.xlu0 %806
    %810 = vset.pattern.permute.xlu0 0
    %811 = vperm.xlu0 %810, %v128
    %v812 = vpop.permute.xlu0 %811
    %815 = vset.pattern.permute.xlu0 0
    %816 = vperm.xlu0 %815, %v129
    %v817 = vpop.permute.xlu0 %816
    %v819 = vmul.f32 %v723, %v742
    %v820 = vmul.f32 %v724, %v747
    %v821 = vmul.f32 %v725, %v752
    %v822 = vmul.f32 %v726, %v757
    %v823 = vmul.f32 %v727, %v762
    %v824 = vmul.f32 %v728, %v767
    %v825 = vmul.f32 %v729, %v772
    %v826 = vmul.f32 %v730, %v777
    %v827 = vmul.f32 %v731, %v782
    %v828 = vmul.f32 %v732, %v787
    %v829 = vmul.f32 %v733, %v792
    %v830 = vmul.f32 %v734, %v797
    %v831 = vmul.f32 %v735, %v802
    %v832 = vmul.f32 %v736, %v807
    %v833 = vmul.f32 %v737, %v812
    %v834 = vmul.f32 %v738, %v817
    %v835 = vadd.f32 %v819, %v820
    %v836 = vadd.f32 %v835, %v821
    %v837 = vadd.f32 %v836, %v822
    %v838 = vadd.f32 %v837, %v823
    %v839 = vadd.f32 %v838, %v824
    %v840 = vadd.f32 %v839, %v825
    %v841 = vadd.f32 %v840, %v826
    %v842 = vadd.f32 %v841, %v827
    %v843 = vadd.f32 %v842, %v828
    %v844 = vadd.f32 %v843, %v829
    %v845 = vadd.f32 %v844, %v830
    %v846 = vadd.f32 %v845, %v831
    %v847 = vadd.f32 %v846, %v832
    %v848 = vadd.f32 %v847, %v833
    %v849 = vadd.f32 %v848, %v834
    %v850 = vrot.slane %v849, 4
    %v851 = vadd.f32 %v849, %v850
    %v852 = vrot.slane %v851, 2
    %v853 = vadd.f32 %v851, %v852
    %v854 = vrot.slane %v853, 1
    %v855 = vadd.f32 %v853, %v854
    %v856 = vmul.f32 %v819, %v723
    %v857 = vmul.f32 %v820, %v724
    %v858 = vmul.f32 %v821, %v725
    %v859 = vmul.f32 %v822, %v726
    %v860 = vmul.f32 %v823, %v727
    %v861 = vmul.f32 %v824, %v728
    %v862 = vmul.f32 %v825, %v729
    %v863 = vmul.f32 %v826, %v730
    %v864 = vmul.f32 %v827, %v731
    %v865 = vmul.f32 %v828, %v732
    %v866 = vmul.f32 %v829, %v733
    %v867 = vmul.f32 %v830, %v734
    %v868 = vmul.f32 %v831, %v735
    %v869 = vmul.f32 %v832, %v736
    %v870 = vmul.f32 %v833, %v737
    %v871 = vmul.f32 %v834, %v738
    %v872 = vadd.f32 %v856, %v857
    %v873 = vadd.f32 %v872, %v858
    %v874 = vadd.f32 %v873, %v859
    %v875 = vadd.f32 %v874, %v860
    %v876 = vadd.f32 %v875, %v861
    %v877 = vadd.f32 %v876, %v862
    %v878 = vadd.f32 %v877, %v863
    %v879 = vadd.f32 %v878, %v864
    %v880 = vadd.f32 %v879, %v865
    %v881 = vadd.f32 %v880, %v866
    %v882 = vadd.f32 %v881, %v867
    %v883 = vadd.f32 %v882, %v868
    %v884 = vadd.f32 %v883, %v869
    %v885 = vadd.f32 %v884, %v870
    %v886 = vadd.f32 %v885, %v871
    %v887 = vrot.slane %v886, 4
    %v888 = vadd.f32 %v886, %v887
    %v889 = vrot.slane %v888, 2
    %v890 = vadd.f32 %v888, %v889
    %v891 = vrot.slane %v890, 1
    %v892 = vadd.f32 %v890, %v891
    %v893 = vmul.f32 %v855, 0.03125
    %v894 = vmul.f32 %v892, 0.03125
    %v895 = vmul.f32 %v893, %v893
    %v896 = vsub.f32 %v894, %v895
    %v897 = vmax.f32 %v896, 0.0
    %v898 = vadd.f32 %v897, 1e-05
    %v899 = vrsqrt.pop %v898
    %v900 = vld [vmem:[%s9] sm:$0x1]
    %v901 = vmul.f32 %v900, %v899
    %v902 = vsub.f32 %v723, %v893
    %v903 = vsub.f32 %v724, %v893
    %v904 = vsub.f32 %v725, %v893
    %v905 = vsub.f32 %v726, %v893
    %v906 = vsub.f32 %v727, %v893
    %v907 = vsub.f32 %v728, %v893
    %v908 = vsub.f32 %v729, %v893
    %v909 = vsub.f32 %v730, %v893
    %v910 = vsub.f32 %v731, %v893
    %v911 = vsub.f32 %v732, %v893
    %v912 = vsub.f32 %v733, %v893
    %v913 = vsub.f32 %v734, %v893
    %v914 = vsub.f32 %v735, %v893
    %v915 = vsub.f32 %v736, %v893
    %v916 = vsub.f32 %v737, %v893
    %v917 = vsub.f32 %v738, %v893
    %v919 = vlaneseq
    %v920 = vshrl.u32 %v919, 7
    %v921 = vsub.s32 0, %v920
    %v922 = vrot.slane %v901, %v921
    %v924 = vmul.f32 %v922, %v902
    %v925 = vmul.f32 %v922, %v903
    %v926 = vmul.f32 %v922, %v904
    %v927 = vmul.f32 %v922, %v905
    %v928 = vmul.f32 %v922, %v906
    %v929 = vmul.f32 %v922, %v907
    %v930 = vmul.f32 %v922, %v908
    %v931 = vmul.f32 %v922, %v909
    %v932 = vmul.f32 %v922, %v910
    %v933 = vmul.f32 %v922, %v911
    %v934 = vmul.f32 %v922, %v912
    %v935 = vmul.f32 %v922, %v913
    %v936 = vmul.f32 %v922, %v914
    %v937 = vmul.f32 %v922, %v915
    %v938 = vmul.f32 %v922, %v916
    %v939 = vmul.f32 %v922, %v917
    %v940 = vld [vmem:[%s10] sm:$0x1]
    %v942 = vlaneseq
    %v943 = vshrl.u32 %v942, 7
    %v944 = vsub.s32 0, %v943
    %v945 = vrot.slane %v940, %v944
    %v947 = vadd.f32 %v924, %v945
    %v948 = vadd.f32 %v925, %v945
    %v949 = vadd.f32 %v926, %v945
    %v950 = vadd.f32 %v927, %v945
    %v951 = vadd.f32 %v928, %v945
    %v952 = vadd.f32 %v929, %v945
    %v953 = vadd.f32 %v930, %v945
    %v954 = vadd.f32 %v931, %v945
    %v955 = vadd.f32 %v932, %v945
    %v956 = vadd.f32 %v933, %v945
    %v957 = vadd.f32 %v934, %v945
    %v958 = vadd.f32 %v935, %v945
    %v959 = vadd.f32 %v936, %v945
    %v960 = vadd.f32 %v937, %v945
    %v961 = vadd.f32 %v938, %v945
    %v962 = vadd.f32 %v939, %v945
    %v963 = vpack.c.bf16 %v948, %v947
    %v964 = vpack.c.bf16 %v950, %v949
    %v965 = vpack.c.bf16 %v952, %v951
    %v966 = vpack.c.bf16 %v954, %v953
    %v967 = vpack.c.bf16 %v956, %v955
    %v968 = vpack.c.bf16 %v958, %v957
    %v969 = vpack.c.bf16 %v960, %v959
    %v970 = vpack.c.bf16 %v962, %v961
    %971 = vst [vmem:[#allocation2] sm:$0xff] %v963
    %972 = vst [vmem:[#allocation2 + $0x8] sm:$0xff] %v964
    %973 = vst [vmem:[#allocation2 + $0x10] sm:$0xff] %v965
    %974 = vst [vmem:[#allocation2 + $0x18] sm:$0xff] %v966
    %975 = vst [vmem:[#allocation2 + $0x20] sm:$0xff] %v967
    %976 = vst [vmem:[#allocation2 + $0x28] sm:$0xff] %v968
    %977 = vst [vmem:[#allocation2 + $0x30] sm:$0xff] %v969
    %978 = vst [vmem:[#allocation2 + $0x38] sm:$0xff] %v970
    %v979 = vld [vmem:[#allocation2] sm:$0xff]
    %v980 = vld [vmem:[#allocation2 + $0x8] sm:$0xff]
    %v981 = vld [vmem:[#allocation2 + $0x10] sm:$0xff]
    %v982 = vld [vmem:[#allocation2 + $0x18] sm:$0xff]
    %v983 = vld [vmem:[#allocation2 + $0x20] sm:$0xff]
    %v984 = vld [vmem:[#allocation2 + $0x28] sm:$0xff]
    %v985 = vld [vmem:[#allocation2 + $0x30] sm:$0xff]
    %v986 = vld [vmem:[#allocation2 + $0x38] sm:$0xff]
    %v987 = vld [vmem:[%s5] sm:$0xf]
    %v988 = vld [vmem:[%s5 + $0x4] sm:$0xf]
    %v989 = vld [vmem:[%s5 + $0x8] sm:$0xf]
    %v990 = vld [vmem:[%s5 + $0xc] sm:$0xf]
    %v991 = vld [vmem:[%s5 + $0x10] sm:$0xf]
    %v992 = vld [vmem:[%s5 + $0x14] sm:$0xf]
    %v993 = vld [vmem:[%s5 + $0x18] sm:$0xf]
    %v994 = vld [vmem:[%s5 + $0x1c] sm:$0xf]
    %v995 = vld [vmem:[%s5 + $0x20] sm:$0xf]
    %v996 = vld [vmem:[%s5 + $0x24] sm:$0xf]
    %v997 = vld [vmem:[%s5 + $0x28] sm:$0xf]
    %v998 = vld [vmem:[%s5 + $0x2c] sm:$0xf]
    %v999 = vld [vmem:[%s5 + $0x30] sm:$0xf]
    %v1000 = vld [vmem:[%s5 + $0x34] sm:$0xf]
    %v1001 = vld [vmem:[%s5 + $0x38] sm:$0xf]
    %v1002 = vld [vmem:[%s5 + $0x3c] sm:$0xf]
    %1003 = vmatprep.subr.bf16.mxu0 0
    %1004 = vmatpush1.bf16.msra.mxu0 %v979
    %1005 = vmatprep.subr.bf16.mxu0 0
    %1006 = vmatpush1.bf16.msra.mxu0 %v980
    %1007 = vmatprep.subr.bf16.mxu0 0
    %1008 = vmatpush1.bf16.msra.mxu0 %v981
    %1009 = vmatprep.subr.bf16.mxu0 0
    %1010 = vmatpush1.bf16.msra.mxu0 %v982
    %1011 = vmatprep.subr.bf16.mxu0 0
    %1012 = vmatpush1.bf16.msra.mxu0 %v983
    %1013 = vmatprep.subr.bf16.mxu0 0
    %1014 = vmatpush1.bf16.msra.mxu0 %v984
    %1015 = vmatprep.subr.bf16.mxu0 0
    %1016 = vmatpush1.bf16.msra.mxu0 %v985
    %1017 = vmatprep.subr.bf16.mxu0 0
    %1018 = vmatpush1.bf16.msra.mxu0 %v986
    %1019 = vmatprep.subr.bf16.mxu0 0
    %1020 = vmatpush1.bf16.msra.mxu0 0
    %1021 = vmatprep.subr.bf16.mxu0 0
    %1022 = vmatpush1.bf16.msra.mxu0 0
    %1023 = vmatprep.subr.bf16.mxu0 0
    %1024 = vmatpush1.bf16.msra.mxu0 0
    %1025 = vmatprep.subr.bf16.mxu0 0
    %1026 = vmatpush1.bf16.msra.mxu0 0
    %1027 = vmatprep.subr.bf16.mxu0 0
    %1028 = vmatpush1.bf16.msra.mxu0 0
    %1029 = vmatprep.subr.bf16.mxu0 0
    %1030 = vmatpush1.bf16.msra.mxu0 0
    %1031 = vmatprep.subr.bf16.mxu0 0
    %1032 = vmatpush1.bf16.msra.mxu0 0
    %1033 = vmatprep.subr.bf16.mxu0 0
    %1034 = vmatpush1.bf16.msra.mxu0 0
    %1035 = vmatprep.mubr.bf16.mxu0 0
    %1036 = vmatmul.mubr.bf16.gmra.mrb[0].mxu0 %v210
    %v1037 = vpop.f32.mrb[0].mxu0
    %v1038 = vadd.f32 0.0, %v1037
    %v1039 = vpop.f32.mrb[0].mxu0
    %v1040 = vpop.f32.mrb[0].mxu0
    %v1041 = vadd.f32 0.0, %v1040
    %v1042 = vpop.f32.mrb[0].mxu0
    %1043 = vmatprep.mubr.bf16.mxu0 0
    %1044 = vmatmul.mubr.bf16.gmra.mrb[0].mxu0 %v211
    %v1045 = vpop.f32.mrb[0].mxu0
    %v1046 = vadd.f32 0.0, %v1045
    %v1047 = vpop.f32.mrb[0].mxu0
    %v1048 = vpop.f32.mrb[0].mxu0
    %v1049 = vadd.f32 0.0, %v1048
    %v1050 = vpop.f32.mrb[0].mxu0
    %1051 = vmatprep.mubr.bf16.mxu0 0
    %1052 = vmatmul.mubr.bf16.gmra.mrb[0].mxu0 %v212
    %v1053 = vpop.f32.mrb[0].mxu0
    %v1054 = vadd.f32 0.0, %v1053
    %v1055 = vpop.f32.mrb[0].mxu0
    %v1056 = vpop.f32.mrb[0].mxu0
    %v1057 = vadd.f32 0.0, %v1056
    %v1058 = vpop.f32.mrb[0].mxu0
    %1059 = vmatprep.mubr.bf16.mxu0 0
    %1060 = vmatmul.mubr.bf16.gmra.mrb[0].mxu0 %v213
    %v1061 = vpop.f32.mrb[0].mxu0
    %v1062 = vadd.f32 0.0, %v1061
    %v1063 = vpop.f32.mrb[0].mxu0
    %v1064 = vpop.f32.mrb[0].mxu0
    %v1065 = vadd.f32 0.0, %v1064
    %v1066 = vpop.f32.mrb[0].mxu0
    %1067 = vmatprep.mubr.bf16.mxu0 0
    %1068 = vmatmul.mubr.bf16.gmra.mrb[0].mxu0 %v214
    %v1069 = vpop.f32.mrb[0].mxu0
    %v1070 = vadd.f32 0.0, %v1069
    %v1071 = vpop.f32.mrb[0].mxu0
    %v1072 = vpop.f32.mrb[0].mxu0
    %v1073 = vadd.f32 0.0, %v1072
    %v1074 = vpop.f32.mrb[0].mxu0
    %1075 = vmatprep.mubr.bf16.mxu0 0
    %1076 = vmatmul.mubr.bf16.gmra.mrb[0].mxu0 %v215
    %v1077 = vpop.f32.mrb[0].mxu0
    %v1078 = vadd.f32 0.0, %v1077
    %v1079 = vpop.f32.mrb[0].mxu0
    %v1080 = vpop.f32.mrb[0].mxu0
    %v1081 = vadd.f32 0.0, %v1080
    %v1082 = vpop.f32.mrb[0].mxu0
    %1083 = vmatprep.mubr.bf16.mxu0 0
    %1084 = vmatmul.mubr.bf16.gmra.mrb[0].mxu0 %v216
    %v1085 = vpop.f32.mrb[0].mxu0
    %v1086 = vadd.f32 0.0, %v1085
    %v1087 = vpop.f32.mrb[0].mxu0
    %v1088 = vpop.f32.mrb[0].mxu0
    %v1089 = vadd.f32 0.0, %v1088
    %v1090 = vpop.f32.mrb[0].mxu0
    %1091 = vmatprep.mubr.bf16.mxu0 0
    %1092 = vmatmul.mubr.bf16.gmra.mrb[0].mxu0 %v217
    %v1093 = vpop.f32.mrb[0].mxu0
    %v1094 = vadd.f32 0.0, %v1093
    %v1095 = vpop.f32.mrb[0].mxu0
    %v1096 = vpop.f32.mrb[0].mxu0
    %v1097 = vadd.f32 0.0, %v1096
    %v1098 = vpop.f32.mrb[0].mxu0
    %1099 = vdwg.mxu0
    %v1100 = vpack.c.bf16 %v1041, %v1038
    %v1101 = vpack.c.bf16 %v1049, %v1046
    %v1102 = vpack.c.bf16 %v1057, %v1054
    %v1103 = vpack.c.bf16 %v1065, %v1062
    %v1104 = vpack.c.bf16 %v1073, %v1070
    %v1105 = vpack.c.bf16 %v1081, %v1078
    %v1106 = vpack.c.bf16 %v1089, %v1086
    %v1107 = vpack.c.bf16 %v1097, %v1094
    %s1108 = scalar_lea.vmem %s6, 1
    %v1109 = vld [vmem:[%s1108] sm:$0x1]
    %v1111 = vlaneseq
    %v1112 = vshrl.u32 %v1111, 7
    %v1113 = vsub.s32 0, %v1112
    %v1114 = vrot.slane %v1109, %v1113
    %v1132 = vunpack.c.l.b16 %v987
    %v1133 = vunpack.c.l.b16 %v988
    %v1134 = vunpack.c.l.b16 %v989
    %v1135 = vunpack.c.l.b16 %v990
    %v1136 = vunpack.c.l.b16 %v991
    %v1137 = vunpack.c.l.b16 %v992
    %v1138 = vunpack.c.l.b16 %v993
    %v1139 = vunpack.c.l.b16 %v994
    %v1140 = vunpack.c.l.b16 %v995
    %v1141 = vunpack.c.l.b16 %v996
    %v1142 = vunpack.c.l.b16 %v997
    %v1143 = vunpack.c.l.b16 %v998
    %v1144 = vunpack.c.l.b16 %v999
    %v1145 = vunpack.c.l.b16 %v1000
    %v1146 = vunpack.c.l.b16 %v1001
    %v1147 = vunpack.c.l.b16 %v1002
    %v1148 = vpack.c.b16 %v1133, %v1132
    %v1149 = vpack.c.b16 %v1135, %v1134
    %v1150 = vpack.c.b16 %v1137, %v1136
    %v1151 = vpack.c.b16 %v1139, %v1138
    %v1152 = vpack.c.b16 %v1141, %v1140
    %v1153 = vpack.c.b16 %v1143, %v1142
    %v1154 = vpack.c.b16 %v1145, %v1144
    %v1155 = vpack.c.b16 %v1147, %v1146
    %1164 = vmatprep.subr.bf16.mxu0 0
    %1165 = vmatpush1.bf16.msra.mxu0 %v1148
    %1166 = vmatprep.subr.bf16.mxu0 0
    %1167 = vmatpush1.bf16.msra.mxu0 %v1149
    %1168 = vmatprep.subr.bf16.mxu0 0
    %1169 = vmatpush1.bf16.msra.mxu0 %v1150
    %1170 = vmatprep.subr.bf16.mxu0 0
    %1171 = vmatpush1.bf16.msra.mxu0 %v1151
    %1172 = vmatprep.subr.bf16.mxu0 0
    %1173 = vmatpush1.bf16.msra.mxu0 %v1152
    %1174 = vmatprep.subr.bf16.mxu0 0
    %1175 = vmatpush1.bf16.msra.mxu0 %v1153
    %1176 = vmatprep.subr.bf16.mxu0 0
    %1177 = vmatpush1.bf16.msra.mxu0 %v1154
    %1178 = vmatprep.subr.bf16.mxu0 0
    %1179 = vmatpush1.bf16.msra.mxu0 %v1155
    %1180 = vmatprep.subr.bf16.mxu0 0
    %1181 = vmatpush1.bf16.msra.mxu0 0
    %1182 = vmatprep.subr.bf16.mxu0 0
    %1183 = vmatpush1.bf16.msra.mxu0 0
    %1184 = vmatprep.subr.bf16.mxu0 0
    %1185 = vmatpush1.bf16.msra.mxu0 0
    %1186 = vmatprep.subr.bf16.mxu0 0
    %1187 = vmatpush1.bf16.msra.mxu0 0
    %1188 = vmatprep.subr.bf16.mxu0 0
    %1189 = vmatpush1.bf16.msra.mxu0 0
    %1190 = vmatprep.subr.bf16.mxu0 0
    %1191 = vmatpush1.bf16.msra.mxu0 0
    %1192 = vmatprep.subr.bf16.mxu0 0
    %1193 = vmatpush1.bf16.msra.mxu0 0
    %1194 = vmatprep.subr.bf16.mxu0 0
    %1195 = vmatpush1.bf16.msra.mxu0 0
    %1196 = vmatprep.mubr.bf16.mxu0 0
    %1197 = vmatmul.mubr.bf16.gmra.mrb[0].mxu0 %v1100
    %v1198 = vpop.f32.mrb[0].mxu0
    %v1199 = vadd.f32 %v1114, %v1198
    %v1200 = vpop.f32.mrb[0].mxu0
    %v1201 = vpop.f32.mrb[0].mxu0
    %v1202 = vadd.f32 %v1114, %v1201
    %v1203 = vpop.f32.mrb[0].mxu0
    %1204 = vmatprep.mubr.bf16.mxu0 0
    %1205 = vmatmul.mubr.bf16.gmra.mrb[0].mxu0 %v1101
    %v1206 = vpop.f32.mrb[0].mxu0
    %v1207 = vadd.f32 %v1114, %v1206
    %v1208 = vpop.f32.mrb[0].mxu0
    %v1209 = vpop.f32.mrb[0].mxu0
    %v1210 = vadd.f32 %v1114, %v1209
    %v1211 = vpop.f32.mrb[0].mxu0
    %1212 = vmatprep.mubr.bf16.mxu0 0
    %1213 = vmatmul.mubr.bf16.gmra.mrb[0].mxu0 %v1102
    %v1214 = vpop.f32.mrb[0].mxu0
    %v1215 = vadd.f32 %v1114, %v1214
    %v1216 = vpop.f32.mrb[0].mxu0
    %v1217 = vpop.f32.mrb[0].mxu0
    %v1218 = vadd.f32 %v1114, %v1217
    %v1219 = vpop.f32.mrb[0].mxu0
    %1220 = vmatprep.mubr.bf16.mxu0 0
    %1221 = vmatmul.mubr.bf16.gmra.mrb[0].mxu0 %v1103
    %v1222 = vpop.f32.mrb[0].mxu0
    %v1223 = vadd.f32 %v1114, %v1222
    %v1224 = vpop.f32.mrb[0].mxu0
    %v1225 = vpop.f32.mrb[0].mxu0
    %v1226 = vadd.f32 %v1114, %v1225
    %v1227 = vpop.f32.mrb[0].mxu0
    %1228 = vmatprep.mubr.bf16.mxu0 0
    %1229 = vmatmul.mubr.bf16.gmra.mrb[0].mxu0 %v1104
    %v1230 = vpop.f32.mrb[0].mxu0
    %v1231 = vadd.f32 %v1114, %v1230
    %v1232 = vpop.f32.mrb[0].mxu0
    %v1233 = vpop.f32.mrb[0].mxu0
    %v1234 = vadd.f32 %v1114, %v1233
    %v1235 = vpop.f32.mrb[0].mxu0
    %1236 = vmatprep.mubr.bf16.mxu0 0
    %1237 = vmatmul.mubr.bf16.gmra.mrb[0].mxu0 %v1105
    %v1238 = vpop.f32.mrb[0].mxu0
    %v1239 = vadd.f32 %v1114, %v1238
    %v1240 = vpop.f32.mrb[0].mxu0
    %v1241 = vpop.f32.mrb[0].mxu0
    %v1242 = vadd.f32 %v1114, %v1241
    %v1243 = vpop.f32.mrb[0].mxu0
    %1244 = vmatprep.mubr.bf16.mxu0 0
    %1245 = vmatmul.mubr.bf16.gmra.mrb[0].mxu0 %v1106
    %v1246 = vpop.f32.mrb[0].mxu0
    %v1247 = vadd.f32 %v1114, %v1246
    %v1248 = vpop.f32.mrb[0].mxu0
    %v1249 = vpop.f32.mrb[0].mxu0
    %v1250 = vadd.f32 %v1114, %v1249
    %v1251 = vpop.f32.mrb[0].mxu0
    %1252 = vmatprep.mubr.bf16.mxu0 0
    %1253 = vmatmul.mubr.bf16.gmra.mrb[0].mxu0 %v1107
    %v1254 = vpop.f32.mrb[0].mxu0
    %v1255 = vadd.f32 %v1114, %v1254
    %v1256 = vpop.f32.mrb[0].mxu0
    %v1257 = vpop.f32.mrb[0].mxu0
    %v1258 = vadd.f32 %v1114, %v1257
    %v1259 = vpop.f32.mrb[0].mxu0
    %1260 = vdwg.mxu0
    %v1261 = vmax.f32 %v1199, 0.0
    %v1262 = vmax.f32 %v1202, 0.0
    %v1263 = vmax.f32 %v1207, 0.0
    %v1264 = vmax.f32 %v1210, 0.0
    %v1265 = vmax.f32 %v1215, 0.0
    %v1266 = vmax.f32 %v1218, 0.0
    %v1267 = vmax.f32 %v1223, 0.0
    %v1268 = vmax.f32 %v1226, 0.0
    %v1269 = vmax.f32 %v1231, 0.0
    %v1270 = vmax.f32 %v1234, 0.0
    %v1271 = vmax.f32 %v1239, 0.0
    %v1272 = vmax.f32 %v1242, 0.0
    %v1273 = vmax.f32 %v1247, 0.0
    %v1274 = vmax.f32 %v1250, 0.0
    %v1275 = vmax.f32 %v1255, 0.0
    %v1276 = vmax.f32 %v1258, 0.0
    %v1277 = vpack.c.bf16 %v1262, %v1261
    %v1278 = vpack.c.bf16 %v1264, %v1263
    %v1279 = vpack.c.bf16 %v1266, %v1265
    %v1280 = vpack.c.bf16 %v1268, %v1267
    %v1281 = vpack.c.bf16 %v1270, %v1269
    %v1282 = vpack.c.bf16 %v1272, %v1271
    %v1283 = vpack.c.bf16 %v1274, %v1273
    %v1284 = vpack.c.bf16 %v1276, %v1275
    %s1285 = scalar_lea.vmem [#allocation9], 64
    %v1286 = vld [vmem:[%s1285] sm:$0xf]
    %v1287 = vld [vmem:[%s1285 + $0x4] sm:$0xf]
    %v1288 = vld [vmem:[%s1285 + $0x8] sm:$0xf]
    %v1289 = vld [vmem:[%s1285 + $0xc] sm:$0xf]
    %v1290 = vld [vmem:[%s1285 + $0x10] sm:$0xf]
    %v1291 = vld [vmem:[%s1285 + $0x14] sm:$0xf]
    %v1292 = vld [vmem:[%s1285 + $0x18] sm:$0xf]
    %v1293 = vld [vmem:[%s1285 + $0x1c] sm:$0xf]
    %v1294 = vld [vmem:[%s1285 + $0x20] sm:$0xf]
    %v1295 = vld [vmem:[%s1285 + $0x24] sm:$0xf]
    %v1296 = vld [vmem:[%s1285 + $0x28] sm:$0xf]
    %v1297 = vld [vmem:[%s1285 + $0x2c] sm:$0xf]
    %v1298 = vld [vmem:[%s1285 + $0x30] sm:$0xf]
    %v1299 = vld [vmem:[%s1285 + $0x34] sm:$0xf]
    %v1300 = vld [vmem:[%s1285 + $0x38] sm:$0xf]
    %v1301 = vld [vmem:[%s1285 + $0x3c] sm:$0xf]
    %s1302 = scalar_lea.vmem %s8, 1
    %v1303 = vld [vmem:[%s1302] sm:$0x1]
    %v1305 = vlaneseq
    %v1306 = vshrl.u32 %v1305, 7
    %v1307 = vsub.s32 0, %v1306
    %v1308 = vrot.slane %v1303, %v1307
    %v1326 = vunpack.c.l.b16 %v1286
    %v1327 = vunpack.c.l.b16 %v1287
    %v1328 = vunpack.c.l.b16 %v1288
    %v1329 = vunpack.c.l.b16 %v1289
    %v1330 = vunpack.c.l.b16 %v1290
    %v1331 = vunpack.c.l.b16 %v1291
    %v1332 = vunpack.c.l.b16 %v1292
    %v1333 = vunpack.c.l.b16 %v1293
    %v1334 = vunpack.c.l.b16 %v1294
    %v1335 = vunpack.c.l.b16 %v1295
    %v1336 = vunpack.c.l.b16 %v1296
    %v1337 = vunpack.c.l.b16 %v1297
    %v1338 = vunpack.c.l.b16 %v1298
    %v1339 = vunpack.c.l.b16 %v1299
    %v1340 = vunpack.c.l.b16 %v1300
    %v1341 = vunpack.c.l.b16 %v1301
    %v1342 = vpack.c.b16 %v1327, %v1326
    %v1343 = vpack.c.b16 %v1329, %v1328
    %v1344 = vpack.c.b16 %v1331, %v1330
    %v1345 = vpack.c.b16 %v1333, %v1332
    %v1346 = vpack.c.b16 %v1335, %v1334
    %v1347 = vpack.c.b16 %v1337, %v1336
    %v1348 = vpack.c.b16 %v1339, %v1338
    %v1349 = vpack.c.b16 %v1341, %v1340
    %1358 = vmatprep.subr.bf16.mxu0 0
    %1359 = vmatpush1.bf16.msra.mxu0 %v1342
    %1360 = vmatprep.subr.bf16.mxu0 0
    %1361 = vmatpush1.bf16.msra.mxu0 %v1343
    %1362 = vmatprep.subr.bf16.mxu0 0
    %1363 = vmatpush1.bf16.msra.mxu0 %v1344
    %1364 = vmatprep.subr.bf16.mxu0 0
    %1365 = vmatpush1.bf16.msra.mxu0 %v1345
    %1366 = vmatprep.subr.bf16.mxu0 0
    %1367 = vmatpush1.bf16.msra.mxu0 %v1346
    %1368 = vmatprep.subr.bf16.mxu0 0
    %1369 = vmatpush1.bf16.msra.mxu0 %v1347
    %1370 = vmatprep.subr.bf16.mxu0 0
    %1371 = vmatpush1.bf16.msra.mxu0 %v1348
    %1372 = vmatprep.subr.bf16.mxu0 0
    %1373 = vmatpush1.bf16.msra.mxu0 %v1349
    %1374 = vmatprep.subr.bf16.mxu0 0
    %1375 = vmatpush1.bf16.msra.mxu0 0
    %1376 = vmatprep.subr.bf16.mxu0 0
    %1377 = vmatpush1.bf16.msra.mxu0 0
    %1378 = vmatprep.subr.bf16.mxu0 0
    %1379 = vmatpush1.bf16.msra.mxu0 0
    %1380 = vmatprep.subr.bf16.mxu0 0
    %1381 = vmatpush1.bf16.msra.mxu0 0
    %1382 = vmatprep.subr.bf16.mxu0 0
    %1383 = vmatpush1.bf16.msra.mxu0 0
    %1384 = vmatprep.subr.bf16.mxu0 0
    %1385 = vmatpush1.bf16.msra.mxu0 0
    %1386 = vmatprep.subr.bf16.mxu0 0
    %1387 = vmatpush1.bf16.msra.mxu0 0
    %1388 = vmatprep.subr.bf16.mxu0 0
    %1389 = vmatpush1.bf16.msra.mxu0 0
    %1390 = vmatprep.mubr.bf16.mxu0 0
    %1391 = vmatmul.mubr.bf16.gmra.mrb[0].mxu0 %v1277
    %v1392 = vpop.f32.mrb[0].mxu0
    %v1393 = vadd.f32 %v1308, %v1392
    %v1394 = vpop.f32.mrb[0].mxu0
    %v1395 = vpop.f32.mrb[0].mxu0
    %v1396 = vadd.f32 %v1308, %v1395
    %v1397 = vpop.f32.mrb[0].mxu0
    %1398 = vmatprep.mubr.bf16.mxu0 0
    %1399 = vmatmul.mubr.bf16.gmra.mrb[0].mxu0 %v1278
    %v1400 = vpop.f32.mrb[0].mxu0
    %v1401 = vadd.f32 %v1308, %v1400
    %v1402 = vpop.f32.mrb[0].mxu0
    %v1403 = vpop.f32.mrb[0].mxu0
    %v1404 = vadd.f32 %v1308, %v1403
    %v1405 = vpop.f32.mrb[0].mxu0
    %1406 = vmatprep.mubr.bf16.mxu0 0
    %1407 = vmatmul.mubr.bf16.gmra.mrb[0].mxu0 %v1279
    %v1408 = vpop.f32.mrb[0].mxu0
    %v1409 = vadd.f32 %v1308, %v1408
    %v1410 = vpop.f32.mrb[0].mxu0
    %v1411 = vpop.f32.mrb[0].mxu0
    %v1412 = vadd.f32 %v1308, %v1411
    %v1413 = vpop.f32.mrb[0].mxu0
    %1414 = vmatprep.mubr.bf16.mxu0 0
    %1415 = vmatmul.mubr.bf16.gmra.mrb[0].mxu0 %v1280
    %v1416 = vpop.f32.mrb[0].mxu0
    %v1417 = vadd.f32 %v1308, %v1416
    %v1418 = vpop.f32.mrb[0].mxu0
    %v1419 = vpop.f32.mrb[0].mxu0
    %v1420 = vadd.f32 %v1308, %v1419
    %v1421 = vpop.f32.mrb[0].mxu0
    %1422 = vmatprep.mubr.bf16.mxu0 0
    %1423 = vmatmul.mubr.bf16.gmra.mrb[0].mxu0 %v1281
    %v1424 = vpop.f32.mrb[0].mxu0
    %v1425 = vadd.f32 %v1308, %v1424
    %v1426 = vpop.f32.mrb[0].mxu0
    %v1427 = vpop.f32.mrb[0].mxu0
    %v1428 = vadd.f32 %v1308, %v1427
    %v1429 = vpop.f32.mrb[0].mxu0
    %1430 = vmatprep.mubr.bf16.mxu0 0
    %1431 = vmatmul.mubr.bf16.gmra.mrb[0].mxu0 %v1282
    %v1432 = vpop.f32.mrb[0].mxu0
    %v1433 = vadd.f32 %v1308, %v1432
    %v1434 = vpop.f32.mrb[0].mxu0
    %v1435 = vpop.f32.mrb[0].mxu0
    %v1436 = vadd.f32 %v1308, %v1435
    %v1437 = vpop.f32.mrb[0].mxu0
    %1438 = vmatprep.mubr.bf16.mxu0 0
    %1439 = vmatmul.mubr.bf16.gmra.mrb[0].mxu0 %v1283
    %v1440 = vpop.f32.mrb[0].mxu0
    %v1441 = vadd.f32 %v1308, %v1440
    %v1442 = vpop.f32.mrb[0].mxu0
    %v1443 = vpop.f32.mrb[0].mxu0
    %v1444 = vadd.f32 %v1308, %v1443
    %v1445 = vpop.f32.mrb[0].mxu0
    %1446 = vmatprep.mubr.bf16.mxu0 0
    %1447 = vmatmul.mubr.bf16.gmra.mrb[0].mxu0 %v1284
    %v1448 = vpop.f32.mrb[0].mxu0
    %v1449 = vadd.f32 %v1308, %v1448
    %v1450 = vpop.f32.mrb[0].mxu0
    %v1451 = vpop.f32.mrb[0].mxu0
    %v1452 = vadd.f32 %v1308, %v1451
    %v1453 = vpop.f32.mrb[0].mxu0
    %1454 = vdwg.mxu0
    %v1455 = vmax.f32 %v1393, 0.0
    %v1456 = vmax.f32 %v1396, 0.0
    %v1457 = vmax.f32 %v1401, 0.0
    %v1458 = vmax.f32 %v1404, 0.0
    %v1459 = vmax.f32 %v1409, 0.0
    %v1460 = vmax.f32 %v1412, 0.0
    %v1461 = vmax.f32 %v1417, 0.0
    %v1462 = vmax.f32 %v1420, 0.0
    %v1463 = vmax.f32 %v1425, 0.0
    %v1464 = vmax.f32 %v1428, 0.0
    %v1465 = vmax.f32 %v1433, 0.0
    %v1466 = vmax.f32 %v1436, 0.0
    %v1467 = vmax.f32 %v1441, 0.0
    %v1468 = vmax.f32 %v1444, 0.0
    %v1469 = vmax.f32 %v1449, 0.0
    %v1470 = vmax.f32 %v1452, 0.0
    %v1471 = vmul.f32 %v1455, %v742
    %v1472 = vmul.f32 %v1456, %v747
    %v1473 = vmul.f32 %v1457, %v752
    %v1474 = vmul.f32 %v1458, %v757
    %v1475 = vmul.f32 %v1459, %v762
    %v1476 = vmul.f32 %v1460, %v767
    %v1477 = vmul.f32 %v1461, %v772
    %v1478 = vmul.f32 %v1462, %v777
    %v1479 = vmul.f32 %v1463, %v782
    %v1480 = vmul.f32 %v1464, %v787
    %v1481 = vmul.f32 %v1465, %v792
    %v1482 = vmul.f32 %v1466, %v797
    %v1483 = vmul.f32 %v1467, %v802
    %v1484 = vmul.f32 %v1468, %v807
    %v1485 = vmul.f32 %v1469, %v812
    %v1486 = vmul.f32 %v1470, %v817
    %v1487 = vadd.f32 %v1471, %v1472
    %v1488 = vadd.f32 %v1487, %v1473
    %v1489 = vadd.f32 %v1488, %v1474
    %v1490 = vadd.f32 %v1489, %v1475
    %v1491 = vadd.f32 %v1490, %v1476
    %v1492 = vadd.f32 %v1491, %v1477
    %v1493 = vadd.f32 %v1492, %v1478
    %v1494 = vadd.f32 %v1493, %v1479
    %v1495 = vadd.f32 %v1494, %v1480
    %v1496 = vadd.f32 %v1495, %v1481
    %v1497 = vadd.f32 %v1496, %v1482
    %v1498 = vadd.f32 %v1497, %v1483
    %v1499 = vadd.f32 %v1498, %v1484
    %v1500 = vadd.f32 %v1499, %v1485
    %v1501 = vadd.f32 %v1500, %v1486
    %v1502 = vrot.slane %v1501, 4
    %v1503 = vadd.f32 %v1501, %v1502
    %v1504 = vrot.slane %v1503, 2
    %v1505 = vadd.f32 %v1503, %v1504
    %v1506 = vrot.slane %v1505, 1
    %v1507 = vadd.f32 %v1505, %v1506
    %v1508 = vmul.f32 %v1471, %v1455
    %v1509 = vmul.f32 %v1472, %v1456
    %v1510 = vmul.f32 %v1473, %v1457
    %v1511 = vmul.f32 %v1474, %v1458
    %v1512 = vmul.f32 %v1475, %v1459
    %v1513 = vmul.f32 %v1476, %v1460
    %v1514 = vmul.f32 %v1477, %v1461
    %v1515 = vmul.f32 %v1478, %v1462
    %v1516 = vmul.f32 %v1479, %v1463
    %v1517 = vmul.f32 %v1480, %v1464
    %v1518 = vmul.f32 %v1481, %v1465
    %v1519 = vmul.f32 %v1482, %v1466
    %v1520 = vmul.f32 %v1483, %v1467
    %v1521 = vmul.f32 %v1484, %v1468
    %v1522 = vmul.f32 %v1485, %v1469
    %v1523 = vmul.f32 %v1486, %v1470
    %v1524 = vadd.f32 %v1508, %v1509
    %v1525 = vadd.f32 %v1524, %v1510
    %v1526 = vadd.f32 %v1525, %v1511
    %v1527 = vadd.f32 %v1526, %v1512
    %v1528 = vadd.f32 %v1527, %v1513
    %v1529 = vadd.f32 %v1528, %v1514
    %v1530 = vadd.f32 %v1529, %v1515
    %v1531 = vadd.f32 %v1530, %v1516
    %v1532 = vadd.f32 %v1531, %v1517
    %v1533 = vadd.f32 %v1532, %v1518
    %v1534 = vadd.f32 %v1533, %v1519
    %v1535 = vadd.f32 %v1534, %v1520
    %v1536 = vadd.f32 %v1535, %v1521
    %v1537 = vadd.f32 %v1536, %v1522
    %v1538 = vadd.f32 %v1537, %v1523
    %v1539 = vrot.slane %v1538, 4
    %v1540 = vadd.f32 %v1538, %v1539
    %v1541 = vrot.slane %v1540, 2
    %v1542 = vadd.f32 %v1540, %v1541
    %v1543 = vrot.slane %v1542, 1
    %v1544 = vadd.f32 %v1542, %v1543
    %v1545 = vmul.f32 %v1507, 0.03125
    %v1546 = vmul.f32 %v1544, 0.03125
    %v1547 = vmul.f32 %v1545, %v1545
    %v1548 = vsub.f32 %v1546, %v1547
    %v1549 = vmax.f32 %v1548, 0.0
    %v1550 = vadd.f32 %v1549, 1e-05
    %v1551 = vrsqrt.pop %v1550
    %s1552 = scalar_lea.vmem %s9, 1
    %v1553 = vld [vmem:[%s1552] sm:$0x1]
    %v1554 = vmul.f32 %v1553, %v1551
    %v1555 = vsub.f32 %v1455, %v1545
    %v1556 = vsub.f32 %v1456, %v1545
    %v1557 = vsub.f32 %v1457, %v1545
    %v1558 = vsub.f32 %v1458, %v1545
    %v1559 = vsub.f32 %v1459, %v1545
    %v1560 = vsub.f32 %v1460, %v1545
    %v1561 = vsub.f32 %v1461, %v1545
    %v1562 = vsub.f32 %v1462, %v1545
    %v1563 = vsub.f32 %v1463, %v1545
    %v1564 = vsub.f32 %v1464, %v1545
    %v1565 = vsub.f32 %v1465, %v1545
    %v1566 = vsub.f32 %v1466, %v1545
    %v1567 = vsub.f32 %v1467, %v1545
    %v1568 = vsub.f32 %v1468, %v1545
    %v1569 = vsub.f32 %v1469, %v1545
    %v1570 = vsub.f32 %v1470, %v1545
    %v1572 = vlaneseq
    %v1573 = vshrl.u32 %v1572, 7
    %v1574 = vsub.s32 0, %v1573
    %v1575 = vrot.slane %v1554, %v1574
    %v1577 = vmul.f32 %v1575, %v1555
    %v1578 = vmul.f32 %v1575, %v1556
    %v1579 = vmul.f32 %v1575, %v1557
    %v1580 = vmul.f32 %v1575, %v1558
    %v1581 = vmul.f32 %v1575, %v1559
    %v1582 = vmul.f32 %v1575, %v1560
    %v1583 = vmul.f32 %v1575, %v1561
    %v1584 = vmul.f32 %v1575, %v1562
    %v1585 = vmul.f32 %v1575, %v1563
    %v1586 = vmul.f32 %v1575, %v1564
    %v1587 = vmul.f32 %v1575, %v1565
    %v1588 = vmul.f32 %v1575, %v1566
    %v1589 = vmul.f32 %v1575, %v1567
    %v1590 = vmul.f32 %v1575, %v1568
    %v1591 = vmul.f32 %v1575, %v1569
    %v1592 = vmul.f32 %v1575, %v1570
    %s1593 = scalar_lea.vmem %s10, 1
    %v1594 = vld [vmem:[%s1593] sm:$0x1]
    %v1596 = vlaneseq
    %v1597 = vshrl.u32 %v1596, 7
    %v1598 = vsub.s32 0, %v1597
    %v1599 = vrot.slane %v1594, %v1598
    %v1601 = vadd.f32 %v1577, %v1599
    %v1602 = vadd.f32 %v1578, %v1599
    %v1603 = vadd.f32 %v1579, %v1599
    %v1604 = vadd.f32 %v1580, %v1599
    %v1605 = vadd.f32 %v1581, %v1599
    %v1606 = vadd.f32 %v1582, %v1599
    %v1607 = vadd.f32 %v1583, %v1599
    %v1608 = vadd.f32 %v1584, %v1599
    %v1609 = vadd.f32 %v1585, %v1599
    %v1610 = vadd.f32 %v1586, %v1599
    %v1611 = vadd.f32 %v1587, %v1599
    %v1612 = vadd.f32 %v1588, %v1599
    %v1613 = vadd.f32 %v1589, %v1599
    %v1614 = vadd.f32 %v1590, %v1599
    %v1615 = vadd.f32 %v1591, %v1599
    %v1616 = vadd.f32 %v1592, %v1599
    %v1617 = vpack.c.bf16 %v1602, %v1601
    %v1618 = vpack.c.bf16 %v1604, %v1603
    %v1619 = vpack.c.bf16 %v1606, %v1605
    %v1620 = vpack.c.bf16 %v1608, %v1607
    %v1621 = vpack.c.bf16 %v1610, %v1609
    %v1622 = vpack.c.bf16 %v1612, %v1611
    %v1623 = vpack.c.bf16 %v1614, %v1613
    %v1624 = vpack.c.bf16 %v1616, %v1615
    %1625 = vst [vmem:[#allocation2] sm:$0xff] %v1617
    %1626 = vst [vmem:[#allocation2 + $0x8] sm:$0xff] %v1618
    %1627 = vst [vmem:[#allocation2 + $0x10] sm:$0xff] %v1619
    %1628 = vst [vmem:[#allocation2 + $0x18] sm:$0xff] %v1620
    %1629 = vst [vmem:[#allocation2 + $0x20] sm:$0xff] %v1621
    %1630 = vst [vmem:[#allocation2 + $0x28] sm:$0xff] %v1622
    %1631 = vst [vmem:[#allocation2 + $0x30] sm:$0xff] %v1623
    %1632 = vst [vmem:[#allocation2 + $0x38] sm:$0xff] %v1624
    %v1633 = vld [vmem:[#allocation2] sm:$0xff]
    %v1634 = vld [vmem:[#allocation2 + $0x8] sm:$0xff]
    %v1635 = vld [vmem:[#allocation2 + $0x10] sm:$0xff]
    %v1636 = vld [vmem:[#allocation2 + $0x18] sm:$0xff]
    %v1637 = vld [vmem:[#allocation2 + $0x20] sm:$0xff]
    %v1638 = vld [vmem:[#allocation2 + $0x28] sm:$0xff]
    %v1639 = vld [vmem:[#allocation2 + $0x30] sm:$0xff]
    %v1640 = vld [vmem:[#allocation2 + $0x38] sm:$0xff]
    %s1641 = scalar_lea.vmem %s5, 64
    %v1642 = vld [vmem:[%s1641] sm:$0xf]
    %v1643 = vld [vmem:[%s1641 + $0x4] sm:$0xf]
    %v1644 = vld [vmem:[%s1641 + $0x8] sm:$0xf]
    %v1645 = vld [vmem:[%s1641 + $0xc] sm:$0xf]
    %v1646 = vld [vmem:[%s1641 + $0x10] sm:$0xf]
    %v1647 = vld [vmem:[%s1641 + $0x14] sm:$0xf]
    %v1648 = vld [vmem:[%s1641 + $0x18] sm:$0xf]
    %v1649 = vld [vmem:[%s1641 + $0x1c] sm:$0xf]
    %v1650 = vld [vmem:[%s1641 + $0x20] sm:$0xf]
    %v1651 = vld [vmem:[%s1641 + $0x24] sm:$0xf]
    %v1652 = vld [vmem:[%s1641 + $0x28] sm:$0xf]
    %v1653 = vld [vmem:[%s1641 + $0x2c] sm:$0xf]
    %v1654 = vld [vmem:[%s1641 + $0x30] sm:$0xf]
    %v1655 = vld [vmem:[%s1641 + $0x34] sm:$0xf]
    %v1656 = vld [vmem:[%s1641 + $0x38] sm:$0xf]
    %v1657 = vld [vmem:[%s1641 + $0x3c] sm:$0xf]
    %1658 = vmatprep.subr.bf16.mxu0 0
    %1659 = vmatpush1.bf16.msra.mxu0 %v1633
    %1660 = vmatprep.subr.bf16.mxu0 0
    %1661 = vmatpush1.bf16.msra.mxu0 %v1634
    %1662 = vmatprep.subr.bf16.mxu0 0
    %1663 = vmatpush1.bf16.msra.mxu0 %v1635
    %1664 = vmatprep.subr.bf16.mxu0 0
    %1665 = vmatpush1.bf16.msra.mxu0 %v1636
    %1666 = vmatprep.subr.bf16.mxu0 0
    %1667 = vmatpush1.bf16.msra.mxu0 %v1637
    %1668 = vmatprep.subr.bf16.mxu0 0
    %1669 = vmatpush1.bf16.msra.mxu0 %v1638
    %1670 = vmatprep.subr.bf16.mxu0 0
    %1671 = vmatpush1.bf16.msra.mxu0 %v1639
    %1672 = vmatprep.subr.bf16.mxu0 0
    %1673 = vmatpush1.bf16.msra.mxu0 %v1640
    %1674 = vmatprep.subr.bf16.mxu0 0
    %1675 = vmatpush1.bf16.msra.mxu0 0
    %1676 = vmatprep.subr.bf16.mxu0 0
    %1677 = vmatpush1.bf16.msra.mxu0 0
    %1678 = vmatprep.subr.bf16.mxu0 0
    %1679 = vmatpush1.bf16.msra.mxu0 0
    %1680 = vmatprep.subr.bf16.mxu0 0
    %1681 = vmatpush1.bf16.msra.mxu0 0
    %1682 = vmatprep.subr.bf16.mxu0 0
    %1683 = vmatpush1.bf16.msra.mxu0 0
    %1684 = vmatprep.subr.bf16.mxu0 0
    %1685 = vmatpush1.bf16.msra.mxu0 0
    %1686 = vmatprep.subr.bf16.mxu0 0
    %1687 = vmatpush1.bf16.msra.mxu0 0
    %1688 = vmatprep.subr.bf16.mxu0 0
    %1689 = vmatpush1.bf16.msra.mxu0 0
    %1690 = vmatprep.mubr.bf16.mxu0 0
    %1691 = vmatmul.mubr.bf16.gmra.mrb[0].mxu0 %v210
    %v1692 = vpop.f32.mrb[0].mxu0
    %v1693 = vadd.f32 0.0, %v1692
    %v1694 = vpop.f32.mrb[0].mxu0
    %v1695 = vpop.f32.mrb[0].mxu0
    %v1696 = vadd.f32 0.0, %v1695
    %v1697 = vpop.f32.mrb[0].mxu0
    %1698 = vmatprep.mubr.bf16.mxu0 0
    %1699 = vmatmul.mubr.bf16.gmra.mrb[0].mxu0 %v211
    %v1700 = vpop.f32.mrb[0].mxu0
    %v1701 = vadd.f32 0.0, %v1700
    %v1702 = vpop.f32.mrb[0].mxu0
    %v1703 = vpop.f32.mrb[0].mxu0
    %v1704 = vadd.f32 0.0, %v1703
    %v1705 = vpop.f32.mrb[0].mxu0
    %1706 = vmatprep.mubr.bf16.mxu0 0
    %1707 = vmatmul.mubr.bf16.gmra.mrb[0].mxu0 %v212
    %v1708 = vpop.f32.mrb[0].mxu0
    %v1709 = vadd.f32 0.0, %v1708
    %v1710 = vpop.f32.mrb[0].mxu0
    %v1711 = vpop.f32.mrb[0].mxu0
    %v1712 = vadd.f32 0.0, %v1711
    %v1713 = vpop.f32.mrb[0].mxu0
    %1714 = vmatprep.mubr.bf16.mxu0 0
    %1715 = vmatmul.mubr.bf16.gmra.mrb[0].mxu0 %v213
    %v1716 = vpop.f32.mrb[0].mxu0
    %v1717 = vadd.f32 0.0, %v1716
    %v1718 = vpop.f32.mrb[0].mxu0
    %v1719 = vpop.f32.mrb[0].mxu0
    %v1720 = vadd.f32 0.0, %v1719
    %v1721 = vpop.f32.mrb[0].mxu0
    %1722 = vmatprep.mubr.bf16.mxu0 0
    %1723 = vmatmul.mubr.bf16.gmra.mrb[0].mxu0 %v214
    %v1724 = vpop.f32.mrb[0].mxu0
    %v1725 = vadd.f32 0.0, %v1724
    %v1726 = vpop.f32.mrb[0].mxu0
    %v1727 = vpop.f32.mrb[0].mxu0
    %v1728 = vadd.f32 0.0, %v1727
    %v1729 = vpop.f32.mrb[0].mxu0
    %1730 = vmatprep.mubr.bf16.mxu0 0
    %1731 = vmatmul.mubr.bf16.gmra.mrb[0].mxu0 %v215
    %v1732 = vpop.f32.mrb[0].mxu0
    %v1733 = vadd.f32 0.0, %v1732
    %v1734 = vpop.f32.mrb[0].mxu0
    %v1735 = vpop.f32.mrb[0].mxu0
    %v1736 = vadd.f32 0.0, %v1735
    %v1737 = vpop.f32.mrb[0].mxu0
    %1738 = vmatprep.mubr.bf16.mxu0 0
    %1739 = vmatmul.mubr.bf16.gmra.mrb[0].mxu0 %v216
    %v1740 = vpop.f32.mrb[0].mxu0
    %v1741 = vadd.f32 0.0, %v1740
    %v1742 = vpop.f32.mrb[0].mxu0
    %v1743 = vpop.f32.mrb[0].mxu0
    %v1744 = vadd.f32 0.0, %v1743
    %v1745 = vpop.f32.mrb[0].mxu0
    %1746 = vmatprep.mubr.bf16.mxu0 0
    %1747 = vmatmul.mubr.bf16.gmra.mrb[0].mxu0 %v217
    %v1748 = vpop.f32.mrb[0].mxu0
    %v1749 = vadd.f32 0.0, %v1748
    %v1750 = vpop.f32.mrb[0].mxu0
    %v1751 = vpop.f32.mrb[0].mxu0
    %v1752 = vadd.f32 0.0, %v1751
    %v1753 = vpop.f32.mrb[0].mxu0
    %1754 = vdwg.mxu0
    %v1755 = vpack.c.bf16 %v1696, %v1693
    %v1756 = vpack.c.bf16 %v1704, %v1701
    %v1757 = vpack.c.bf16 %v1712, %v1709
    %v1758 = vpack.c.bf16 %v1720, %v1717
    %v1759 = vpack.c.bf16 %v1728, %v1725
    %v1760 = vpack.c.bf16 %v1736, %v1733
    %v1761 = vpack.c.bf16 %v1744, %v1741
    %v1762 = vpack.c.bf16 %v1752, %v1749
    %s1763 = scalar_lea.vmem %s6, 2
    %v1764 = vld [vmem:[%s1763] sm:$0x1]
    %v1766 = vlaneseq
    %v1767 = vshrl.u32 %v1766, 7
    %v1768 = vsub.s32 0, %v1767
    %v1769 = vrot.slane %v1764, %v1768
    %v1787 = vunpack.c.l.b16 %v1642
    %v1788 = vunpack.c.l.b16 %v1643
    %v1789 = vunpack.c.l.b16 %v1644
    %v1790 = vunpack.c.l.b16 %v1645
    %v1791 = vunpack.c.l.b16 %v1646
    %v1792 = vunpack.c.l.b16 %v1647
    %v1793 = vunpack.c.l.b16 %v1648
    %v1794 = vunpack.c.l.b16 %v1649
    %v1795 = vunpack.c.l.b16 %v1650
    %v1796 = vunpack.c.l.b16 %v1651
    %v1797 = vunpack.c.l.b16 %v1652
    %v1798 = vunpack.c.l.b16 %v1653
    %v1799 = vunpack.c.l.b16 %v1654
    %v1800 = vunpack.c.l.b16 %v1655
    %v1801 = vunpack.c.l.b16 %v1656
    %v1802 = vunpack.c.l.b16 %v1657
    %v1803 = vpack.c.b16 %v1788, %v1787
    %v1804 = vpack.c.b16 %v1790, %v1789
    %v1805 = vpack.c.b16 %v1792, %v1791
    %v1806 = vpack.c.b16 %v1794, %v1793
    %v1807 = vpack.c.b16 %v1796, %v1795
    %v1808 = vpack.c.b16 %v1798, %v1797
    %v1809 = vpack.c.b16 %v1800, %v1799
    %v1810 = vpack.c.b16 %v1802, %v1801
    %1819 = vmatprep.subr.bf16.mxu0 0
    %1820 = vmatpush1.bf16.msra.mxu0 %v1803
    %1821 = vmatprep.subr.bf16.mxu0 0
    %1822 = vmatpush1.bf16.msra.mxu0 %v1804
    %1823 = vmatprep.subr.bf16.mxu0 0
    %1824 = vmatpush1.bf16.msra.mxu0 %v1805
    %1825 = vmatprep.subr.bf16.mxu0 0
    %1826 = vmatpush1.bf16.msra.mxu0 %v1806
    %1827 = vmatprep.subr.bf16.mxu0 0
    %1828 = vmatpush1.bf16.msra.mxu0 %v1807
    %1829 = vmatprep.subr.bf16.mxu0 0
    %1830 = vmatpush1.bf16.msra.mxu0 %v1808
    %1831 = vmatprep.subr.bf16.mxu0 0
    %1832 = vmatpush1.bf16.msra.mxu0 %v1809
    %1833 = vmatprep.subr.bf16.mxu0 0
    %1834 = vmatpush1.bf16.msra.mxu0 %v1810
    %1835 = vmatprep.subr.bf16.mxu0 0
    %1836 = vmatpush1.bf16.msra.mxu0 0
    %1837 = vmatprep.subr.bf16.mxu0 0
    %1838 = vmatpush1.bf16.msra.mxu0 0
    %1839 = vmatprep.subr.bf16.mxu0 0
    %1840 = vmatpush1.bf16.msra.mxu0 0
    %1841 = vmatprep.subr.bf16.mxu0 0
    %1842 = vmatpush1.bf16.msra.mxu0 0
    %1843 = vmatprep.subr.bf16.mxu0 0
    %1844 = vmatpush1.bf16.msra.mxu0 0
    %1845 = vmatprep.subr.bf16.mxu0 0
    %1846 = vmatpush1.bf16.msra.mxu0 0
    %1847 = vmatprep.subr.bf16.mxu0 0
    %1848 = vmatpush1.bf16.msra.mxu0 0
    %1849 = vmatprep.subr.bf16.mxu0 0
    %1850 = vmatpush1.bf16.msra.mxu0 0
    %1851 = vmatprep.mubr.bf16.mxu0 0
    %1852 = vmatmul.mubr.bf16.gmra.mrb[0].mxu0 %v1755
    %v1853 = vpop.f32.mrb[0].mxu0
    %v1854 = vadd.f32 %v1769, %v1853
    %v1855 = vpop.f32.mrb[0].mxu0
    %v1856 = vpop.f32.mrb[0].mxu0
    %v1857 = vadd.f32 %v1769, %v1856
    %v1858 = vpop.f32.mrb[0].mxu0
    %1859 = vmatprep.mubr.bf16.mxu0 0
    %1860 = vmatmul.mubr.bf16.gmra.mrb[0].mxu0 %v1756
    %v1861 = vpop.f32.mrb[0].mxu0
    %v1862 = vadd.f32 %v1769, %v1861
    %v1863 = vpop.f32.mrb[0].mxu0
    %v1864 = vpop.f32.mrb[0].mxu0
    %v1865 = vadd.f32 %v1769, %v1864
    %v1866 = vpop.f32.mrb[0].mxu0
    %1867 = vmatprep.mubr.bf16.mxu0 0
    %1868 = vmatmul.mubr.bf16.gmra.mrb[0].mxu0 %v1757
    %v1869 = vpop.f32.mrb[0].mxu0
    %v1870 = vadd.f32 %v1769, %v1869
    %v1871 = vpop.f32.mrb[0].mxu0
    %v1872 = vpop.f32.mrb[0].mxu0
    %v1873 = vadd.f32 %v1769, %v1872
    %v1874 = vpop.f32.mrb[0].mxu0
    %1875 = vmatprep.mubr.bf16.mxu0 0
    %1876 = vmatmul.mubr.bf16.gmra.mrb[0].mxu0 %v1758
    %v1877 = vpop.f32.mrb[0].mxu0
    %v1878 = vadd.f32 %v1769, %v1877
    %v1879 = vpop.f32.mrb[0].mxu0
    %v1880 = vpop.f32.mrb[0].mxu0
    %v1881 = vadd.f32 %v1769, %v1880
    %v1882 = vpop.f32.mrb[0].mxu0
    %1883 = vmatprep.mubr.bf16.mxu0 0
    %1884 = vmatmul.mubr.bf16.gmra.mrb[0].mxu0 %v1759
    %v1885 = vpop.f32.mrb[0].mxu0
    %v1886 = vadd.f32 %v1769, %v1885
    %v1887 = vpop.f32.mrb[0].mxu0
    %v1888 = vpop.f32.mrb[0].mxu0
    %v1889 = vadd.f32 %v1769, %v1888
    %v1890 = vpop.f32.mrb[0].mxu0
    %1891 = vmatprep.mubr.bf16.mxu0 0
    %1892 = vmatmul.mubr.bf16.gmra.mrb[0].mxu0 %v1760
    %v1893 = vpop.f32.mrb[0].mxu0
    %v1894 = vadd.f32 %v1769, %v1893
    %v1895 = vpop.f32.mrb[0].mxu0
    %v1896 = vpop.f32.mrb[0].mxu0
    %v1897 = vadd.f32 %v1769, %v1896
    %v1898 = vpop.f32.mrb[0].mxu0
    %1899 = vmatprep.mubr.bf16.mxu0 0
    %1900 = vmatmul.mubr.bf16.gmra.mrb[0].mxu0 %v1761
    %v1901 = vpop.f32.mrb[0].mxu0
    %v1902 = vadd.f32 %v1769, %v1901
    %v1903 = vpop.f32.mrb[0].mxu0
    %v1904 = vpop.f32.mrb[0].mxu0
    %v1905 = vadd.f32 %v1769, %v1904
    %v1906 = vpop.f32.mrb[0].mxu0
    %1907 = vmatprep.mubr.bf16.mxu0 0
    %1908 = vmatmul.mubr.bf16.gmra.mrb[0].mxu0 %v1762
    %v1909 = vpop.f32.mrb[0].mxu0
    %v1910 = vadd.f32 %v1769, %v1909
    %v1911 = vpop.f32.mrb[0].mxu0
    %v1912 = vpop.f32.mrb[0].mxu0
    %v1913 = vadd.f32 %v1769, %v1912
    %v1914 = vpop.f32.mrb[0].mxu0
    %1915 = vdwg.mxu0
    %v1916 = vmax.f32 %v1854, 0.0
    %v1917 = vmax.f32 %v1857, 0.0
    %v1918 = vmax.f32 %v1862, 0.0
    %v1919 = vmax.f32 %v1865, 0.0
    %v1920 = vmax.f32 %v1870, 0.0
    %v1921 = vmax.f32 %v1873, 0.0
    %v1922 = vmax.f32 %v1878, 0.0
    %v1923 = vmax.f32 %v1881, 0.0
    %v1924 = vmax.f32 %v1886, 0.0
    %v1925 = vmax.f32 %v1889, 0.0
    %v1926 = vmax.f32 %v1894, 0.0
    %v1927 = vmax.f32 %v1897, 0.0
    %v1928 = vmax.f32 %v1902, 0.0
    %v1929 = vmax.f32 %v1905, 0.0
    %v1930 = vmax.f32 %v1910, 0.0
    %v1931 = vmax.f32 %v1913, 0.0
    %v1932 = vpack.c.bf16 %v1917, %v1916
    %v1933 = vpack.c.bf16 %v1919, %v1918
    %v1934 = vpack.c.bf16 %v1921, %v1920
    %v1935 = vpack.c.bf16 %v1923, %v1922
    %v1936 = vpack.c.bf16 %v1925, %v1924
    %v1937 = vpack.c.bf16 %v1927, %v1926
    %v1938 = vpack.c.bf16 %v1929, %v1928
    %v1939 = vpack.c.bf16 %v1931, %v1930
    %s1940 = scalar_lea.vmem [#allocation9], 128
    %v1941 = vld [vmem:[%s1940] sm:$0xf]
    %v1942 = vld [vmem:[%s1940 + $0x4] sm:$0xf]
    %v1943 = vld [vmem:[%s1940 + $0x8] sm:$0xf]
    %v1944 = vld [vmem:[%s1940 + $0xc] sm:$0xf]
    %v1945 = vld [vmem:[%s1940 + $0x10] sm:$0xf]
    %v1946 = vld [vmem:[%s1940 + $0x14] sm:$0xf]
    %v1947 = vld [vmem:[%s1940 + $0x18] sm:$0xf]
    %v1948 = vld [vmem:[%s1940 + $0x1c] sm:$0xf]
    %v1949 = vld [vmem:[%s1940 + $0x20] sm:$0xf]
    %v1950 = vld [vmem:[%s1940 + $0x24] sm:$0xf]
    %v1951 = vld [vmem:[%s1940 + $0x28] sm:$0xf]
    %v1952 = vld [vmem:[%s1940 + $0x2c] sm:$0xf]
    %v1953 = vld [vmem:[%s1940 + $0x30] sm:$0xf]
    %v1954 = vld [vmem:[%s1940 + $0x34] sm:$0xf]
    %v1955 = vld [vmem:[%s1940 + $0x38] sm:$0xf]
    %v1956 = vld [vmem:[%s1940 + $0x3c] sm:$0xf]
    %s1957 = scalar_lea.vmem %s8, 2
    %v1958 = vld [vmem:[%s1957] sm:$0x1]
    %v1960 = vlaneseq
    %v1961 = vshrl.u32 %v1960, 7
    %v1962 = vsub.s32 0, %v1961
    %v1963 = vrot.slane %v1958, %v1962
    %v1981 = vunpack.c.l.b16 %v1941
    %v1982 = vunpack.c.l.b16 %v1942
    %v1983 = vunpack.c.l.b16 %v1943
    %v1984 = vunpack.c.l.b16 %v1944
    %v1985 = vunpack.c.l.b16 %v1945
    %v1986 = vunpack.c.l.b16 %v1946
    %v1987 = vunpack.c.l.b16 %v1947
    %v1988 = vunpack.c.l.b16 %v1948
    %v1989 = vunpack.c.l.b16 %v1949
    %v1990 = vunpack.c.l.b16 %v1950
    %v1991 = vunpack.c.l.b16 %v1951
    %v1992 = vunpack.c.l.b16 %v1952
    %v1993 = vunpack.c.l.b16 %v1953
    %v1994 = vunpack.c.l.b16 %v1954
    %v1995 = vunpack.c.l.b16 %v1955
    %v1996 = vunpack.c.l.b16 %v1956
    %v1997 = vpack.c.b16 %v1982, %v1981
    %v1998 = vpack.c.b16 %v1984, %v1983
    %v1999 = vpack.c.b16 %v1986, %v1985
    %v2000 = vpack.c.b16 %v1988, %v1987
    %v2001 = vpack.c.b16 %v1990, %v1989
    %v2002 = vpack.c.b16 %v1992, %v1991
    %v2003 = vpack.c.b16 %v1994, %v1993
    %v2004 = vpack.c.b16 %v1996, %v1995
    %2013 = vmatprep.subr.bf16.mxu0 0
    %2014 = vmatpush1.bf16.msra.mxu0 %v1997
    %2015 = vmatprep.subr.bf16.mxu0 0
    %2016 = vmatpush1.bf16.msra.mxu0 %v1998
    %2017 = vmatprep.subr.bf16.mxu0 0
    %2018 = vmatpush1.bf16.msra.mxu0 %v1999
    %2019 = vmatprep.subr.bf16.mxu0 0
    %2020 = vmatpush1.bf16.msra.mxu0 %v2000
    %2021 = vmatprep.subr.bf16.mxu0 0
    %2022 = vmatpush1.bf16.msra.mxu0 %v2001
    %2023 = vmatprep.subr.bf16.mxu0 0
    %2024 = vmatpush1.bf16.msra.mxu0 %v2002
    %2025 = vmatprep.subr.bf16.mxu0 0
    %2026 = vmatpush1.bf16.msra.mxu0 %v2003
    %2027 = vmatprep.subr.bf16.mxu0 0
    %2028 = vmatpush1.bf16.msra.mxu0 %v2004
    %2029 = vmatprep.subr.bf16.mxu0 0
    %2030 = vmatpush1.bf16.msra.mxu0 0
    %2031 = vmatprep.subr.bf16.mxu0 0
    %2032 = vmatpush1.bf16.msra.mxu0 0
    %2033 = vmatprep.subr.bf16.mxu0 0
    %2034 = vmatpush1.bf16.msra.mxu0 0
    %2035 = vmatprep.subr.bf16.mxu0 0
    %2036 = vmatpush1.bf16.msra.mxu0 0
    %2037 = vmatprep.subr.bf16.mxu0 0
    %2038 = vmatpush1.bf16.msra.mxu0 0
    %2039 = vmatprep.subr.bf16.mxu0 0
    %2040 = vmatpush1.bf16.msra.mxu0 0
    %2041 = vmatprep.subr.bf16.mxu0 0
    %2042 = vmatpush1.bf16.msra.mxu0 0
    %2043 = vmatprep.subr.bf16.mxu0 0
    %2044 = vmatpush1.bf16.msra.mxu0 0
    %2045 = vmatprep.mubr.bf16.mxu0 0
    %2046 = vmatmul.mubr.bf16.gmra.mrb[0].mxu0 %v1932
    %v2047 = vpop.f32.mrb[0].mxu0
    %v2048 = vadd.f32 %v1963, %v2047
    %v2049 = vpop.f32.mrb[0].mxu0
    %v2050 = vpop.f32.mrb[0].mxu0
    %v2051 = vadd.f32 %v1963, %v2050
    %v2052 = vpop.f32.mrb[0].mxu0
    %2053 = vmatprep.mubr.bf16.mxu0 0
    %2054 = vmatmul.mubr.bf16.gmra.mrb[0].mxu0 %v1933
    %v2055 = vpop.f32.mrb[0].mxu0
    %v2056 = vadd.f32 %v1963, %v2055
    %v2057 = vpop.f32.mrb[0].mxu0
    %v2058 = vpop.f32.mrb[0].mxu0
    %v2059 = vadd.f32 %v1963, %v2058
    %v2060 = vpop.f32.mrb[0].mxu0
    %2061 = vmatprep.mubr.bf16.mxu0 0
    %2062 = vmatmul.mubr.bf16.gmra.mrb[0].mxu0 %v1934
    %v2063 = vpop.f32.mrb[0].mxu0
    %v2064 = vadd.f32 %v1963, %v2063
    %v2065 = vpop.f32.mrb[0].mxu0
    %v2066 = vpop.f32.mrb[0].mxu0
    %v2067 = vadd.f32 %v1963, %v2066
    %v2068 = vpop.f32.mrb[0].mxu0
    %2069 = vmatprep.mubr.bf16.mxu0 0
    %2070 = vmatmul.mubr.bf16.gmra.mrb[0].mxu0 %v1935
    %v2071 = vpop.f32.mrb[0].mxu0
    %v2072 = vadd.f32 %v1963, %v2071
    %v2073 = vpop.f32.mrb[0].mxu0
    %v2074 = vpop.f32.mrb[0].mxu0
    %v2075 = vadd.f32 %v1963, %v2074
    %v2076 = vpop.f32.mrb[0].mxu0
    %2077 = vmatprep.mubr.bf16.mxu0 0
    %2078 = vmatmul.mubr.bf16.gmra.mrb[0].mxu0 %v1936
    %v2079 = vpop.f32.mrb[0].mxu0
    %v2080 = vadd.f32 %v1963, %v2079
    %v2081 = vpop.f32.mrb[0].mxu0
    %v2082 = vpop.f32.mrb[0].mxu0
    %v2083 = vadd.f32 %v1963, %v2082
    %v2084 = vpop.f32.mrb[0].mxu0
    %2085 = vmatprep.mubr.bf16.mxu0 0
    %2086 = vmatmul.mubr.bf16.gmra.mrb[0].mxu0 %v1937
    %v2087 = vpop.f32.mrb[0].mxu0
    %v2088 = vadd.f32 %v1963, %v2087
    %v2089 = vpop.f32.mrb[0].mxu0
    %v2090 = vpop.f32.mrb[0].mxu0
    %v2091 = vadd.f32 %v1963, %v2090
    %v2092 = vpop.f32.mrb[0].mxu0
    %2093 = vmatprep.mubr.bf16.mxu0 0
    %2094 = vmatmul.mubr.bf16.gmra.mrb[0].mxu0 %v1938
    %v2095 = vpop.f32.mrb[0].mxu0
    %v2096 = vadd.f32 %v1963, %v2095
    %v2097 = vpop.f32.mrb[0].mxu0
    %v2098 = vpop.f32.mrb[0].mxu0
    %v2099 = vadd.f32 %v1963, %v2098
    %v2100 = vpop.f32.mrb[0].mxu0
    %2101 = vmatprep.mubr.bf16.mxu0 0
    %2102 = vmatmul.mubr.bf16.gmra.mrb[0].mxu0 %v1939
    %v2103 = vpop.f32.mrb[0].mxu0
    %v2104 = vadd.f32 %v1963, %v2103
    %v2105 = vpop.f32.mrb[0].mxu0
    %v2106 = vpop.f32.mrb[0].mxu0
    %v2107 = vadd.f32 %v1963, %v2106
    %v2108 = vpop.f32.mrb[0].mxu0
    %2109 = vdwg.mxu0
    %v2110 = vmax.f32 %v2048, 0.0
    %v2111 = vmax.f32 %v2051, 0.0
    %v2112 = vmax.f32 %v2056, 0.0
    %v2113 = vmax.f32 %v2059, 0.0
    %v2114 = vmax.f32 %v2064, 0.0
    %v2115 = vmax.f32 %v2067, 0.0
    %v2116 = vmax.f32 %v2072, 0.0
    %v2117 = vmax.f32 %v2075, 0.0
    %v2118 = vmax.f32 %v2080, 0.0
    %v2119 = vmax.f32 %v2083, 0.0
    %v2120 = vmax.f32 %v2088, 0.0
    %v2121 = vmax.f32 %v2091, 0.0
    %v2122 = vmax.f32 %v2096, 0.0
    %v2123 = vmax.f32 %v2099, 0.0
    %v2124 = vmax.f32 %v2104, 0.0
    %v2125 = vmax.f32 %v2107, 0.0
    %v2126 = vmul.f32 %v2110, %v742
    %v2127 = vmul.f32 %v2111, %v747
    %v2128 = vmul.f32 %v2112, %v752
    %v2129 = vmul.f32 %v2113, %v757
    %v2130 = vmul.f32 %v2114, %v762
    %v2131 = vmul.f32 %v2115, %v767
    %v2132 = vmul.f32 %v2116, %v772
    %v2133 = vmul.f32 %v2117, %v777
    %v2134 = vmul.f32 %v2118, %v782
    %v2135 = vmul.f32 %v2119, %v787
    %v2136 = vmul.f32 %v2120, %v792
    %v2137 = vmul.f32 %v2121, %v797
    %v2138 = vmul.f32 %v2122, %v802
    %v2139 = vmul.f32 %v2123, %v807
    %v2140 = vmul.f32 %v2124, %v812
    %v2141 = vmul.f32 %v2125, %v817
    %v2142 = vadd.f32 %v2126, %v2127
    %v2143 = vadd.f32 %v2142, %v2128
    %v2144 = vadd.f32 %v2143, %v2129
    %v2145 = vadd.f32 %v2144, %v2130
    %v2146 = vadd.f32 %v2145, %v2131
    %v2147 = vadd.f32 %v2146, %v2132
    %v2148 = vadd.f32 %v2147, %v2133
    %v2149 = vadd.f32 %v2148, %v2134
    %v2150 = vadd.f32 %v2149, %v2135
    %v2151 = vadd.f32 %v2150, %v2136
    %v2152 = vadd.f32 %v2151, %v2137
    %v2153 = vadd.f32 %v2152, %v2138
    %v2154 = vadd.f32 %v2153, %v2139
    %v2155 = vadd.f32 %v2154, %v2140
    %v2156 = vadd.f32 %v2155, %v2141
    %v2157 = vrot.slane %v2156, 4
    %v2158 = vadd.f32 %v2156, %v2157
    %v2159 = vrot.slane %v2158, 2
    %v2160 = vadd.f32 %v2158, %v2159
    %v2161 = vrot.slane %v2160, 1
    %v2162 = vadd.f32 %v2160, %v2161
    %v2163 = vmul.f32 %v2126, %v2110
    %v2164 = vmul.f32 %v2127, %v2111
    %v2165 = vmul.f32 %v2128, %v2112
    %v2166 = vmul.f32 %v2129, %v2113
    %v2167 = vmul.f32 %v2130, %v2114
    %v2168 = vmul.f32 %v2131, %v2115
    %v2169 = vmul.f32 %v2132, %v2116
    %v2170 = vmul.f32 %v2133, %v2117
    %v2171 = vmul.f32 %v2134, %v2118
    %v2172 = vmul.f32 %v2135, %v2119
    %v2173 = vmul.f32 %v2136, %v2120
    %v2174 = vmul.f32 %v2137, %v2121
    %v2175 = vmul.f32 %v2138, %v2122
    %v2176 = vmul.f32 %v2139, %v2123
    %v2177 = vmul.f32 %v2140, %v2124
    %v2178 = vmul.f32 %v2141, %v2125
    %v2179 = vadd.f32 %v2163, %v2164
    %v2180 = vadd.f32 %v2179, %v2165
    %v2181 = vadd.f32 %v2180, %v2166
    %v2182 = vadd.f32 %v2181, %v2167
    %v2183 = vadd.f32 %v2182, %v2168
    %v2184 = vadd.f32 %v2183, %v2169
    %v2185 = vadd.f32 %v2184, %v2170
    %v2186 = vadd.f32 %v2185, %v2171
    %v2187 = vadd.f32 %v2186, %v2172
    %v2188 = vadd.f32 %v2187, %v2173
    %v2189 = vadd.f32 %v2188, %v2174
    %v2190 = vadd.f32 %v2189, %v2175
    %v2191 = vadd.f32 %v2190, %v2176
    %v2192 = vadd.f32 %v2191, %v2177
    %v2193 = vadd.f32 %v2192, %v2178
    %v2194 = vrot.slane %v2193, 4
    %v2195 = vadd.f32 %v2193, %v2194
    %v2196 = vrot.slane %v2195, 2
    %v2197 = vadd.f32 %v2195, %v2196
    %v2198 = vrot.slane %v2197, 1
    %v2199 = vadd.f32 %v2197, %v2198
    %v2200 = vmul.f32 %v2162, 0.03125
    %v2201 = vmul.f32 %v2199, 0.03125
    %v2202 = vmul.f32 %v2200, %v2200
    %v2203 = vsub.f32 %v2201, %v2202
    %v2204 = vmax.f32 %v2203, 0.0
    %v2205 = vadd.f32 %v2204, 1e-05
    %v2206 = vrsqrt.pop %v2205
    %s2207 = scalar_lea.vmem %s9, 2
    %v2208 = vld [vmem:[%s2207] sm:$0x1]
    %v2209 = vmul.f32 %v2208, %v2206
    %v2210 = vsub.f32 %v2110, %v2200
    %v2211 = vsub.f32 %v2111, %v2200
    %v2212 = vsub.f32 %v2112, %v2200
    %v2213 = vsub.f32 %v2113, %v2200
    %v2214 = vsub.f32 %v2114, %v2200
    %v2215 = vsub.f32 %v2115, %v2200
    %v2216 = vsub.f32 %v2116, %v2200
    %v2217 = vsub.f32 %v2117, %v2200
    %v2218 = vsub.f32 %v2118, %v2200
    %v2219 = vsub.f32 %v2119, %v2200
    %v2220 = vsub.f32 %v2120, %v2200
    %v2221 = vsub.f32 %v2121, %v2200
    %v2222 = vsub.f32 %v2122, %v2200
    %v2223 = vsub.f32 %v2123, %v2200
    %v2224 = vsub.f32 %v2124, %v2200
    %v2225 = vsub.f32 %v2125, %v2200
    %v2227 = vlaneseq
    %v2228 = vshrl.u32 %v2227, 7
    %v2229 = vsub.s32 0, %v2228
    %v2230 = vrot.slane %v2209, %v2229
    %v2232 = vmul.f32 %v2230, %v2210
    %v2233 = vmul.f32 %v2230, %v2211
    %v2234 = vmul.f32 %v2230, %v2212
    %v2235 = vmul.f32 %v2230, %v2213
    %v2236 = vmul.f32 %v2230, %v2214
    %v2237 = vmul.f32 %v2230, %v2215
    %v2238 = vmul.f32 %v2230, %v2216
    %v2239 = vmul.f32 %v2230, %v2217
    %v2240 = vmul.f32 %v2230, %v2218
    %v2241 = vmul.f32 %v2230, %v2219
    %v2242 = vmul.f32 %v2230, %v2220
    %v2243 = vmul.f32 %v2230, %v2221
    %v2244 = vmul.f32 %v2230, %v2222
    %v2245 = vmul.f32 %v2230, %v2223
    %v2246 = vmul.f32 %v2230, %v2224
    %v2247 = vmul.f32 %v2230, %v2225
    %s2248 = scalar_lea.vmem %s10, 2
    %v2249 = vld [vmem:[%s2248] sm:$0x1]
    %v2251 = vlaneseq
    %v2252 = vshrl.u32 %v2251, 7
    %v2253 = vsub.s32 0, %v2252
    %v2254 = vrot.slane %v2249, %v2253
    %v2256 = vadd.f32 %v2232, %v2254
    %v2257 = vadd.f32 %v2233, %v2254
    %v2258 = vadd.f32 %v2234, %v2254
    %v2259 = vadd.f32 %v2235, %v2254
    %v2260 = vadd.f32 %v2236, %v2254
    %v2261 = vadd.f32 %v2237, %v2254
    %v2262 = vadd.f32 %v2238, %v2254
    %v2263 = vadd.f32 %v2239, %v2254
    %v2264 = vadd.f32 %v2240, %v2254
    %v2265 = vadd.f32 %v2241, %v2254
    %v2266 = vadd.f32 %v2242, %v2254
    %v2267 = vadd.f32 %v2243, %v2254
    %v2268 = vadd.f32 %v2244, %v2254
    %v2269 = vadd.f32 %v2245, %v2254
    %v2270 = vadd.f32 %v2246, %v2254
    %v2271 = vadd.f32 %v2247, %v2254
    %v2272 = vpack.c.bf16 %v2257, %v2256
    %v2273 = vpack.c.bf16 %v2259, %v2258
    %v2274 = vpack.c.bf16 %v2261, %v2260
    %v2275 = vpack.c.bf16 %v2263, %v2262
    %v2276 = vpack.c.bf16 %v2265, %v2264
    %v2277 = vpack.c.bf16 %v2267, %v2266
    %v2278 = vpack.c.bf16 %v2269, %v2268
    %v2279 = vpack.c.bf16 %v2271, %v2270
    %2280 = vst [vmem:[#allocation2] sm:$0xff] %v2272
    %2281 = vst [vmem:[#allocation2 + $0x8] sm:$0xff] %v2273
    %2282 = vst [vmem:[#allocation2 + $0x10] sm:$0xff] %v2274
    %2283 = vst [vmem:[#allocation2 + $0x18] sm:$0xff] %v2275
    %2284 = vst [vmem:[#allocation2 + $0x20] sm:$0xff] %v2276
    %2285 = vst [vmem:[#allocation2 + $0x28] sm:$0xff] %v2277
    %2286 = vst [vmem:[#allocation2 + $0x30] sm:$0xff] %v2278
    %2287 = vst [vmem:[#allocation2 + $0x38] sm:$0xff] %v2279
    %v2288 = vld [vmem:[%s3] sm:$0xf]
    %v2289 = vld [vmem:[#allocation2] sm:$0xff]
    %v2290 = vld [vmem:[#allocation2 + $0x8] sm:$0xff]
    %v2291 = vld [vmem:[#allocation2 + $0x10] sm:$0xff]
    %v2292 = vld [vmem:[#allocation2 + $0x18] sm:$0xff]
    %v2293 = vld [vmem:[#allocation2 + $0x20] sm:$0xff]
    %v2294 = vld [vmem:[#allocation2 + $0x28] sm:$0xff]
    %v2295 = vld [vmem:[#allocation2 + $0x30] sm:$0xff]
    %v2296 = vld [vmem:[#allocation2 + $0x38] sm:$0xff]
    %2297 = vmatprep.subr.bf16.mxu0 0
    %2298 = vmatpush1.bf16.msra.mxu0 %v2289
    %2299 = vmatprep.subr.bf16.mxu0 0
    %2300 = vmatpush1.bf16.msra.mxu0 %v2290
    %2301 = vmatprep.subr.bf16.mxu0 0
    %2302 = vmatpush1.bf16.msra.mxu0 %v2291
    %2303 = vmatprep.subr.bf16.mxu0 0
    %2304 = vmatpush1.bf16.msra.mxu0 %v2292
    %2305 = vmatprep.subr.bf16.mxu0 0
    %2306 = vmatpush1.bf16.msra.mxu0 %v2293
    %2307 = vmatprep.subr.bf16.mxu0 0
    %2308 = vmatpush1.bf16.msra.mxu0 %v2294
    %2309 = vmatprep.subr.bf16.mxu0 0
    %2310 = vmatpush1.bf16.msra.mxu0 %v2295
    %2311 = vmatprep.subr.bf16.mxu0 0
    %2312 = vmatpush1.bf16.msra.mxu0 %v2296
    %2313 = vmatprep.subr.bf16.mxu0 0
    %2314 = vmatpush1.bf16.msra.mxu0 0
    %2315 = vmatprep.subr.bf16.mxu0 0
    %2316 = vmatpush1.bf16.msra.mxu0 0
    %2317 = vmatprep.subr.bf16.mxu0 0
    %2318 = vmatpush1.bf16.msra.mxu0 0
    %2319 = vmatprep.subr.bf16.mxu0 0
    %2320 = vmatpush1.bf16.msra.mxu0 0
    %2321 = vmatprep.subr.bf16.mxu0 0
    %2322 = vmatpush1.bf16.msra.mxu0 0
    %2323 = vmatprep.subr.bf16.mxu0 0
    %2324 = vmatpush1.bf16.msra.mxu0 0
    %2325 = vmatprep.subr.bf16.mxu0 0
    %2326 = vmatpush1.bf16.msra.mxu0 0
    %2327 = vmatprep.subr.bf16.mxu0 0
    %2328 = vmatpush1.bf16.msra.mxu0 0
    %2329 = vmatprep.mubr.bf16.mxu0 0
    %2330 = vmatmul.mubr.bf16.gmra.mrb[0].mxu0 %v2288
    %v2331 = vpop.f32.mrb[0].mxu0
    %v2332 = vadd.f32 0.0, %v2331
    %v2333 = vpop.f32.mrb[0].mxu0
    %v2334 = vpop.f32.mrb[0].mxu0
    %v2335 = vpop.f32.mrb[0].mxu0
    %2336 = vdwg.mxu0
    %v2337 = vpack.c.bf16 %v2332, %v2332
    %v2338 = vld [vmem:[#allocation11] sm:$0xf]
    %v2339 = vld [vmem:[#allocation11 + $0x4] sm:$0xf]
    %v2340 = vld [vmem:[#allocation11 + $0x8] sm:$0xf]
    %v2341 = vld [vmem:[#allocation11 + $0xc] sm:$0xf]
    %v2342 = vld [vmem:[#allocation11 + $0x10] sm:$0xf]
    %v2343 = vld [vmem:[#allocation11 + $0x14] sm:$0xf]
    %v2344 = vld [vmem:[#allocation11 + $0x18] sm:$0xf]
    %v2345 = vld [vmem:[#allocation11 + $0x1c] sm:$0xf]
    %v2346 = vld [vmem:[#allocation11 + $0x20] sm:$0xf]
    %v2347 = vld [vmem:[#allocation11 + $0x24] sm:$0xf]
    %v2348 = vld [vmem:[#allocation11 + $0x28] sm:$0xf]
    %v2349 = vld [vmem:[#allocation11 + $0x2c] sm:$0xf]
    %v2350 = vld [vmem:[#allocation11 + $0x30] sm:$0xf]
    %v2351 = vld [vmem:[#allocation11 + $0x34] sm:$0xf]
    %v2352 = vld [vmem:[#allocation11 + $0x38] sm:$0xf]
    %v2353 = vld [vmem:[#allocation11 + $0x3c] sm:$0xf]
    %v2354 = vld [vmem:[%s12] sm:$0x1]
    %v2356 = vlaneseq
    %v2357 = vshrl.u32 %v2356, 7
    %v2358 = vsub.s32 0, %v2357
    %v2359 = vrot.slane %v2354, %v2358
    %v2377 = vunpack.c.l.b16 %v2338
    %v2378 = vunpack.c.l.b16 %v2339
    %v2379 = vunpack.c.l.b16 %v2340
    %v2380 = vunpack.c.l.b16 %v2341
    %v2381 = vunpack.c.l.b16 %v2342
    %v2382 = vunpack.c.l.b16 %v2343
    %v2383 = vunpack.c.l.b16 %v2344
    %v2384 = vunpack.c.l.b16 %v2345
    %v2385 = vunpack.c.l.b16 %v2346
    %v2386 = vunpack.c.l.b16 %v2347
    %v2387 = vunpack.c.l.b16 %v2348
    %v2388 = vunpack.c.l.b16 %v2349
    %v2389 = vunpack.c.l.b16 %v2350
    %v2390 = vunpack.c.l.b16 %v2351
    %v2391 = vunpack.c.l.b16 %v2352
    %v2392 = vunpack.c.l.b16 %v2353
    %v2393 = vpack.c.b16 %v2378, %v2377
    %v2394 = vpack.c.b16 %v2380, %v2379
    %v2395 = vpack.c.b16 %v2382, %v2381
    %v2396 = vpack.c.b16 %v2384, %v2383
    %v2397 = vpack.c.b16 %v2386, %v2385
    %v2398 = vpack.c.b16 %v2388, %v2387
    %v2399 = vpack.c.b16 %v2390, %v2389
    %v2400 = vpack.c.b16 %v2392, %v2391
    %2409 = vmatprep.subr.bf16.mxu0 0
    %2410 = vmatpush1.bf16.msra.mxu0 %v2393
    %2411 = vmatprep.subr.bf16.mxu0 0
    %2412 = vmatpush1.bf16.msra.mxu0 %v2394
    %2413 = vmatprep.subr.bf16.mxu0 0
    %2414 = vmatpush1.bf16.msra.mxu0 %v2395
    %2415 = vmatprep.subr.bf16.mxu0 0
    %2416 = vmatpush1.bf16.msra.mxu0 %v2396
    %2417 = vmatprep.subr.bf16.mxu0 0
    %2418 = vmatpush1.bf16.msra.mxu0 %v2397
    %2419 = vmatprep.subr.bf16.mxu0 0
    %2420 = vmatpush1.bf16.msra.mxu0 %v2398
    %2421 = vmatprep.subr.bf16.mxu0 0
    %2422 = vmatpush1.bf16.msra.mxu0 %v2399
    %2423 = vmatprep.subr.bf16.mxu0 0
    %2424 = vmatpush1.bf16.msra.mxu0 %v2400
    %2425 = vmatprep.subr.bf16.mxu0 0
    %2426 = vmatpush1.bf16.msra.mxu0 0
    %2427 = vmatprep.subr.bf16.mxu0 0
    %2428 = vmatpush1.bf16.msra.mxu0 0
    %2429 = vmatprep.subr.bf16.mxu0 0
    %2430 = vmatpush1.bf16.msra.mxu0 0
    %2431 = vmatprep.subr.bf16.mxu0 0
    %2432 = vmatpush1.bf16.msra.mxu0 0
    %2433 = vmatprep.subr.bf16.mxu0 0
    %2434 = vmatpush1.bf16.msra.mxu0 0
    %2435 = vmatprep.subr.bf16.mxu0 0
    %2436 = vmatpush1.bf16.msra.mxu0 0
    %2437 = vmatprep.subr.bf16.mxu0 0
    %2438 = vmatpush1.bf16.msra.mxu0 0
    %2439 = vmatprep.subr.bf16.mxu0 0
    %2440 = vmatpush1.bf16.msra.mxu0 0
    %2441 = vmatprep.mubr.bf16.mxu0 0
    %2442 = vmatmul.mubr.bf16.gmra.mrb[0].mxu0 %v2337
    %v2443 = vpop.f32.mrb[0].mxu0
    %v2444 = vadd.f32 %v2359, %v2443
    %v2445 = vpop.f32.mrb[0].mxu0
    %v2446 = vpop.f32.mrb[0].mxu0
    %v2447 = vpop.f32.mrb[0].mxu0
    %2448 = vdwg.mxu0
    %v2449 = vmax.f32 %v2444, 0.0
    %2450 = vst [vmem:[#allocation12] sm:$0xff] %v2449
    // Predicated region
    $region74: #{tpu_custom_call.1} parent=1 // pred_check
      _
    $region75: #{tpu_custom_call.1} parent=1 // pred_check_branch
      %2452 = sbr.rel (0) target = $region77
    $region76: #{tpu_custom_call.1} parent=1 // pred_region
      %s2454 = ssub.s32 128, 128
      %2455 = vsyncadd [#allocation5], %s2454
      %s2457 = sshll.u32 [#allocation12], 4
      %s2458 = int_to_ptr.vmem [resolvable:$true] %s2457
      %2460 = dma.vmem_to_hbm [thread:$0]  %s2458, 128, %s13, [#allocation5]
    $region77: #{tpu_custom_call.1} parent=1 // pred_fallthru
      _
    // Predicated region
    $region78: #{tpu_custom_call.1} parent=1 // pred_check
      _
    $region79: #{tpu_custom_call.1} parent=1 // pred_check_branch
      %2462 = sbr.rel (0) target = $region81
    $region80: #{tpu_custom_call.1} parent=1 // pred_region
      %2463 = dma.done [#allocation5], 128
    $region81: #{tpu_custom_call.1} parent=1 // pred_fallthru
      _
    %2464 = vsyncpa [#allocation4], 1
    %2465 = vsyncpa [#allocation7], 1
    %2466 = vsyncpa [#allocation10], 1
    %2467 = vsyncpa [#allocation5], 1

</llo_original>
